<compile_context>
chip_gen: v7x
topology: tpu7x:2x2x1
jax: 0.10.0
libtpu: 0.0.40
codegen_flags: <defaults>
</compile_context>

<pallas_src>
import functools

import jax
import jax.numpy as jnp
from jax.experimental import pallas as pl
from jax.experimental.pallas import tpu as pltpu

_ALPHA = 1.0
_BETA = 10.0
_NEG_RATIO = 3.0
_EPS = 1e-6

_BCE_MAX = 100.0            # F.binary_cross_entropy clamps log terms at -100
_DEFAULT_BLOCK_ROWS = 2048  # 2048 rows x 128 lanes x 4B = 1 MiB per plane per step
_SEARCH_EDGES = 16          # edges per threshold-search level
_SEARCH_LEVELS = 4          # final bracket width ~ 100 / 15**4 ~= 2e-3


def _cdiv(a, b):
    return -(-a // b)


def _vmem_limit_bytes():
    # 64 MiB on 128-MiB parts (v5e/v6e), ~48 MiB on v7x (64 MiB physical).
    try:
        cap = pltpu.get_tpu_info().vmem_capacity_bytes
    except Exception:
        cap = 64 * 1024 * 1024
    return min(64 * 1024 * 1024, (cap * 3) // 4)


def _pick_row_tiles(rows, target):
    """(block_rows, num_tiles, ragged) for tiling `rows` in blocks of <= target rows."""
    target = max(8, target)
    if rows <= target:
        return rows, 1, False                      # full extent: always a legal block
    t8 = (target // 8) * 8
    lo = max(8, min(256, t8))
    for blk in range(t8, lo - 1, -8):              # prefer an exact divisor: no ragged tile
        if rows % blk == 0:
            return blk, rows // blk, False
    return t8, _cdiv(rows, t8), True               # ragged last tile, guarded in-kernel


# --------------------------------------------------------------------------- #
# Main fused elementwise / reduction kernel                                    #
# --------------------------------------------------------------------------- #
def _db_loss_kernel(preds_ref, gts_ref, negloss_ref, stats_ref, *, blk, rows_valid, ragged):
    # preds_ref: (1, 3, 1, blk, 128)   gts_ref: (4, 1, 1, blk, 128)
    # negloss_ref: (1, 1, blk, 128)    stats_ref: (1, 1, 8, 128) accumulator over t
    t = pl.program_id(2)
    f32 = jnp.float32

    prob = preds_ref[0, 0, 0, :, :].astype(f32)
    thr = preds_ref[0, 1, 0, :, :].astype(f32)
    binm = preds_ref[0, 2, 0, :, :].astype(f32)
    gt = gts_ref[0, 0, 0, :, :].astype(f32)
    mask = gts_ref[1, 0, 0, :, :].astype(f32)
    thr_gt = gts_ref[2, 0, 0, :, :].astype(f32)
    text_mask = gts_ref[3, 0, 0, :, :].astype(f32)

    if ragged:
        # Last tile reads past the end of the (rows_valid, 128) plane: clamp every
        # plane so OOB garbage (possibly NaN) can never reach a log() or a sum.
        row = jax.lax.broadcasted_iota(jnp.int32, (blk, 128), 0) + t * blk
        valid = row < rows_valid
        prob = jnp.where(valid, prob, 0.5)
        thr = jnp.where(valid, thr, 0.0)
        binm = jnp.where(valid, binm, 0.0)
        gt = jnp.where(valid, gt, 0.0)
        mask = jnp.where(valid, mask, 0.0)
        thr_gt = jnp.where(valid, thr_gt, 0.0)
        text_mask = jnp.where(valid, text_mask, 0.0)

    # ---- BalanceCrossEntropyLoss pieces (binary gt -> single log) ----
    positive = gt * mask
    negative = mask - positive                       # == (1 - gt) * mask
    q = jnp.where(gt > 0.5, prob, 1.0 - prob)
    bce = jnp.minimum(-jnp.log(q), _BCE_MAX)         # == PyTorch's -100 log clamp

    neg_loss = bce * negative
    negloss_ref[0, 0, :, :] = neg_loss               # feeds the OHEM threshold search

    # ---- L1Loss (threshold map) and DiceLoss (approx binary map) pieces ----
    l1 = jnp.abs(thr - thr_gt) * text_mask
    pre = binm * mask

    def lane_sum(x):
        return jnp.sum(x, axis=0, keepdims=True)     # (1, 128): sublane reduce only

    partial = jnp.concatenate(
        [
            lane_sum(positive),        # 0 positive count   (== dice "c" for binary gt)
            lane_sum(mask),            # 1 mask sum         (neg_avail = row1 - row0)
            lane_sum(bce * positive),  # 2 positive BCE sum
            lane_sum(l1),              # 3 L1 numerator
            lane_sum(text_mask),       # 4 L1 denominator
            lane_sum(pre * positive),  # 5 dice a
            lane_sum(pre * pre),       # 6 dice b
            lane_sum(neg_loss),        # 7 total negative BCE sum (spare row, keeps 8x128 tile)
        ],
        axis=0,
    )                                                 # (8, 128)

    @pl.when(t == 0)
    def _init():
        stats_ref[...] = jnp.zeros_like(stats_ref)

    stats_ref[0, 0, :, :] = stats_ref[0, 0, :, :] + partial


# --------------------------------------------------------------------------- #
# OHEM top-k threshold-search kernel (replaces the global sort)                #
# --------------------------------------------------------------------------- #
def _topk_search_kernel(edges_ref, neg_ref, out_ref, *, blk, rows_valid, ragged,
                        num_edges, with_sums):
    # edges_ref: (num_edges,) f32 in SMEM     neg_ref: (blk, 128)
    # out_ref:   (2, num_edges, 128) accumulator (row 0: counts >= edge, row 1: sums)
    s = pl.program_id(0)
    v = neg_ref[...]
    if ragged:
        row = jax.lax.broadcasted_iota(jnp.int32, (blk, 128), 0) + s * blk
        v = jnp.where(row < rows_valid, v, -1.0)      # below every edge >= 0

    @pl.when(s == 0)
    def _init():
        out_ref[...] = jnp.zeros_like(out_ref)

    cnts = []
    sums = []
    for j in range(num_edges):                        # static unrolled loop
        ge = v >= edges_ref[j]
        cnts.append(jnp.sum(jnp.where(ge, 1.0, 0.0), axis=0, keepdims=True))
        if with_sums:
            sums.append(jnp.sum(jnp.where(ge, v, 0.0), axis=0, keepdims=True))
    out_ref[0, :, :] = out_ref[0, :, :] + jnp.concatenate(cnts, axis=0)
    if with_sums:
        out_ref[1, :, :] = out_ref[1, :, :] + jnp.concatenate(sums, axis=0)


def _topk_search_call(neg_flat, edges, *, block_rows, with_sums):
    rows = neg_flat.shape[0]
    blk, num_tiles, ragged = _pick_row_tiles(rows, block_rows)
    kernel = functools.partial(
        _topk_search_kernel, blk=blk, rows_valid=rows, ragged=ragged,
        num_edges=edges.shape[0], with_sums=with_sums)
    return pl.pallas_call(
        kernel,
        grid=(num_tiles,),
        in_specs=[
            pl.BlockSpec(memory_space=pltpu.MemorySpace.SMEM),   # edges
            pl.BlockSpec((blk, 128), lambda s: (s, 0)),          # neg-loss map tile
        ],
        out_specs=pl.BlockSpec((2, edges.shape[0], 128), lambda s: (0, 0, 0)),
        out_shape=jax.ShapeDtypeStruct((2, edges.shape[0], 128), jnp.float32),
        compiler_params=pltpu.CompilerParams(
            dimension_semantics=("arbitrary",),
            vmem_limit_bytes=_vmem_limit_bytes(),
        ),
    )(edges, neg_flat)


def _ohem_topk_sum(neg_map, k_f, *, block_rows):
    """Sum of the k largest entries of neg_map without a global sort.

    Uses the exact identity  topk_sum(k) = sum_{v>=t} v + (k - count_{v>=t}) * t
    for any t in [v_(k+1), v_(k)]; t is located by a multilevel count search.
    """
    neg_flat = neg_map.reshape(-1, 128)
    lo = jnp.float32(0.0)
    width = jnp.float32(_BCE_MAX)
    chosen_cnt = jnp.float32(0.0)
    chosen_sum = jnp.float32(0.0)
    for level in range(_SEARCH_LEVELS):
        last = level == _SEARCH_LEVELS - 1
        step = width / (_SEARCH_EDGES - 1)
        edges = lo + step * jnp.arange(_SEARCH_EDGES, dtype=jnp.float32)
        out = _topk_search_call(neg_flat, edges, block_rows=block_rows, with_sums=last)
        cnt = jnp.sum(out[0].astype(jnp.int32), axis=-1).astype(jnp.float32)  # (E,)
        j = jnp.maximum(jnp.sum((cnt >= k_f).astype(jnp.int32)) - 1, 0)
        lo = edges[j]
        width = step
        if last:
            chosen_cnt = cnt[j]
            chosen_sum = jnp.sum(out[1], axis=-1)[j]
    # TODO(synk): exact unless several distinct values land inside the final
    # ~2e-3-wide bracket at the k-th value (residual <= count_in_bracket * 2e-3).
    return chosen_sum + (k_f - chosen_cnt) * lo


# --------------------------------------------------------------------------- #
# Wrapper                                                                      #
# --------------------------------------------------------------------------- #
def db_loss(preds, gts, *, block_target=_DEFAULT_BLOCK_ROWS):
    N, C, H, W = preds.shape
    assert C == 3, "DBLoss kernel expects preds with 3 channels"
    assert gts.shape == (4, N, H, W)

    hw = H * W
    preds_f = preds.reshape(N, 3, hw)
    gts_f = gts.reshape(4, N, hw)
    if hw % 128:
        # TODO(synk): rare fallback that materializes one padded copy when H*W is
        # not a multiple of 128 (production DBNet sizes always are).
        pad = 128 - hw % 128
        preds_f = jnp.pad(preds_f, ((0, 0), (0, 0), (0, pad)))
        gts_f = jnp.pad(gts_f, ((0, 0), (0, 0), (0, pad)))
        hw = hw + pad
    rows = hw // 128

    # 2-way spatial split keeps both v7x TensorCores busy even when N == 1.
    p2 = 2 if rows % 2 == 0 else 1
    rows2 = rows // p2
    blk, num_tiles, ragged = _pick_row_tiles(rows2, block_target)

    preds_t = preds_f.reshape(N, 3, p2, rows2, 128)   # contiguous split: free reshape
    gts_t = gts_f.reshape(4, N, p2, rows2, 128)

    npix = N * rows * 128
    kernel = functools.partial(_db_loss_kernel, blk=blk, rows_valid=rows2, ragged=ragged)
    neg_map, stats = pl.pallas_call(
        kernel,
        grid=(N, p2, num_tiles),
        in_specs=[
            pl.BlockSpec((1, 3, 1, blk, 128), lambda n, p, t: (n, 0, p, t, 0)),
            pl.BlockSpec((4, 1, 1, blk, 128), lambda n, p, t: (0, n, p, t, 0)),
        ],
        out_specs=[
            pl.BlockSpec((1, 1, blk, 128), lambda n, p, t: (n, p, t, 0)),
            pl.BlockSpec((1, 1, 8, 128), lambda n, p, t: (n, p, 0, 0)),
        ],
        out_shape=[
            jax.ShapeDtypeStruct((N, p2, rows2, 128), jnp.float32),
            jax.ShapeDtypeStruct((N, p2, 8, 128), jnp.float32),
        ],
        compiler_params=pltpu.CompilerParams(
            dimension_semantics=("parallel", "parallel", "arbitrary"),
            vmem_limit_bytes=_vmem_limit_bytes(),
        ),
        cost_estimate=pl.CostEstimate(
            flops=48 * npix, transcendentals=npix, bytes_accessed=36 * npix),
    )(preds_t, gts_t)

    # Exact integer pixel counts (per-lane partials are << 2**24, so the cast is exact).
    pos_count_i = jnp.sum(stats[:, :, 0, :].astype(jnp.int32))
    mask_sum_i = jnp.sum(stats[:, :, 1, :].astype(jnp.int32))
    neg_avail_i = mask_sum_i - pos_count_i
    pos_count_f = pos_count_i.astype(jnp.float32)
    neg_count_i = jnp.minimum(
        neg_avail_i, jnp.floor(pos_count_f * _NEG_RATIO).astype(jnp.int32))
    neg_count_f = neg_count_i.astype(jnp.float32)

    pos_loss_sum = jnp.sum(stats[:, :, 2, :])
    l1_num = jnp.sum(stats[:, :, 3, :])
    l1_den = jnp.sum(stats[:, :, 4, :])
    dice_a = jnp.sum(stats[:, :, 5, :], axis=(1, 2))
    dice_b = jnp.sum(stats[:, :, 6, :], axis=(1, 2))
    dice_c = jnp.sum(stats[:, :, 0, :], axis=(1, 2))  # (gt*mask)^2 == gt*mask (binary)

    neg_topk_sum = _ohem_topk_sum(neg_map, neg_count_f, block_rows=block_target)

    prob_loss = (pos_loss_sum + neg_topk_sum) / (pos_count_f + neg_count_f + _EPS)
    threshold_loss = l1_num / (l1_den + _EPS)
    dice = 2.0 * dice_a / ((dice_b + _EPS) + (dice_c + _EPS))
    binary_loss = 1.0 - jnp.mean(dice)

    prob_threshold_loss = prob_loss + _BETA * threshold_loss
    total_loss = prob_threshold_loss + _ALPHA * binary_loss
    return total_loss


# --------------------------------------------------------------------------- #
# Pure-JAX reference (direct transcription of the PyTorch module) for checking #
# --------------------------------------------------------------------------- #
def _db_loss_reference(preds, gts):
    prob = preds[:, 0].astype(jnp.float32)
    thr = preds[:, 1].astype(jnp.float32)
    binm = preds[:, 2].astype(jnp.float32)
    gt = gts[0].astype(jnp.float32)
    mask = gts[1].astype(jnp.float32)
    thr_gt = gts[2].astype(jnp.float32)
    text_mask = gts[3].astype(jnp.float32)

    positive = gt * mask
    negative = (1.0 - gt) * mask
    pos_count = jnp.sum(positive)
    neg_count = jnp.minimum(jnp.sum(negative), jnp.floor(pos_count * _NEG_RATIO))

    log_p = jnp.maximum(jnp.log(prob), -100.0)
    log_1mp = jnp.maximum(jnp.log(1.0 - prob), -100.0)
    bce = -(gt * log_p + (1.0 - gt) * log_1mp)

    pos_loss = jnp.sum(bce * positive)
    neg_flat = (bce * negative).reshape(-1)
    srt = -jnp.sort(-neg_flat)
    keep = jnp.arange(srt.shape[0]) < neg_count.astype(jnp.int32)
    neg_topk = jnp.sum(jnp.where(keep, srt, 0.0))
    prob_loss = (pos_loss + neg_topk) / (pos_count + neg_count + _EPS)

    threshold_loss = jnp.sum(jnp.abs(thr - thr_gt) * text_mask) / (jnp.sum(text_mask) + _EPS)

    n = preds.shape[0]
    pre = (binm * mask).reshape(n, -1)
    g = (gt * mask).reshape(n, -1)
    a = jnp.sum(pre * g, axis=1)
    b = jnp.sum(pre * pre, axis=1) + _EPS
    c = jnp.sum(g * g, axis=1) + _EPS
    binary_loss = 1.0 - jnp.mean(2.0 * a / (b + c))

    return prob_loss + _BETA * threshold_loss + _ALPHA * binary_loss


def _make_inputs(key, n, h, w, gt_thresh):
    k1, k2, k3, k4, k5 = jax.random.split(key, 5)
    preds = jax.nn.sigmoid(jax.random.normal(k1, (n, 3, h, w), dtype=jnp.float32))
    prob_gt = (jax.random.uniform(k2, (n, h, w)) > gt_thresh).astype(jnp.float32)
    sup_mask = (jax.random.uniform(k3, (n, h, w)) > 0.2).astype(jnp.float32)
    thr_gt = jax.random.uniform(k4, (n, h, w), dtype=jnp.float32)
    text_mask = (jax.random.uniform(k5, (n, h, w)) > 0.5).astype(jnp.float32)
    gts = jnp.stack([prob_gt, sup_mask, thr_gt, text_mask], axis=0)  # (4, N, H, W)
    return preds, gts


if __name__ == "__main__":
    key = jax.random.PRNGKey(0)
    k_a, k_b = jax.random.split(key)

    # Config 1: default tiling (N=2, 16x16); OHEM keeps every negative pixel.
    preds, gts = _make_inputs(k_a, 2, 16, 16, gt_thresh=0.7)
    total = jax.jit(db_loss)(preds, gts)
    jax.block_until_ready(total)
    ref = _db_loss_reference(preds, gts)
    assert jnp.isfinite(total)
    assert abs(float(total) - float(ref)) <= 2e-3 * (abs(float(ref)) + 1.0), (total, ref)

    # Config 2: odd row count with a tiny block target -> exercises the ragged-tile
    # guards of both kernels and the k < available-negatives OHEM branch.
    preds2, gts2 = _make_inputs(k_b, 1, 16, 88, gt_thresh=0.9)
    total2 = jax.jit(functools.partial(db_loss, block_target=8))(preds2, gts2)
    jax.block_until_ready(total2)
    ref2 = _db_loss_reference(preds2, gts2)
    assert jnp.isfinite(total2)
    assert abs(float(total2) - float(ref2)) <= 2e-3 * (abs(float(ref2)) + 1.0), (total2, ref2)

    print("KERNEL_OK")
</pallas_src>

<mosaic_0001>
module attributes {stable_mosaic.version = 11 : i64} {
  func.func @_db_loss_kernel(%arg0: i32, %arg1: i32, %arg2: i32, %arg3: memref<1x3x1x1x128xf32, #tpu.memory_space<vmem>>, %arg4: memref<4x1x1x1x128xf32, #tpu.memory_space<vmem>>, %arg5: memref<1x1x1x128xf32, #tpu.memory_space<vmem>>, %arg6: memref<1x1x8x128xf32, #tpu.memory_space<vmem>>) attributes {dimension_semantics = [#tpu.dimension_semantics<parallel>, #tpu.dimension_semantics<parallel>, #tpu.dimension_semantics<arbitrary>], iteration_bounds = array<i64: 2, 2, 1>, scalar_prefetch = 0 : i64, scratch_operands = 0 : i64, tpu.core_type = #tpu.core_type<tc>, window_params = [{transform_indices = @transform_0, window_bounds = array<i64: 1, 3, 1, 1, 128>}, {transform_indices = @transform_1, window_bounds = array<i64: 4, 1, 1, 1, 128>}, {transform_indices = @transform_2, window_bounds = array<i64: 1, 1, 1, 128>}, {transform_indices = @transform_3, window_bounds = array<i64: 1, 1, 8, 128>}]} {
    %c0 = arith.constant 0 : index
    %c0_0 = arith.constant 0 : index
    %c0_1 = arith.constant 0 : index
    %c0_2 = arith.constant 0 : index
    %c0_3 = arith.constant 0 : index
    %0 = vector.load %arg3[%c0, %c0_0, %c0_1, %c0_2, %c0_3] : memref<1x3x1x1x128xf32, #tpu.memory_space<vmem>>, vector<1x1x1x1x128xf32>
    %1 = vector.shape_cast %0 : vector<1x1x1x1x128xf32> to vector<1x128xf32>
    %c0_4 = arith.constant 0 : index
    %c1 = arith.constant 1 : index
    %c0_5 = arith.constant 0 : index
    %c0_6 = arith.constant 0 : index
    %c0_7 = arith.constant 0 : index
    %2 = vector.load %arg3[%c0_4, %c1, %c0_5, %c0_6, %c0_7] : memref<1x3x1x1x128xf32, #tpu.memory_space<vmem>>, vector<1x1x1x1x128xf32>
    %3 = vector.shape_cast %2 : vector<1x1x1x1x128xf32> to vector<1x128xf32>
    %c0_8 = arith.constant 0 : index
    %c2 = arith.constant 2 : index
    %c0_9 = arith.constant 0 : index
    %c0_10 = arith.constant 0 : index
    %c0_11 = arith.constant 0 : index
    %4 = vector.load %arg3[%c0_8, %c2, %c0_9, %c0_10, %c0_11] : memref<1x3x1x1x128xf32, #tpu.memory_space<vmem>>, vector<1x1x1x1x128xf32>
    %5 = vector.shape_cast %4 : vector<1x1x1x1x128xf32> to vector<1x128xf32>
    %c0_12 = arith.constant 0 : index
    %c0_13 = arith.constant 0 : index
    %c0_14 = arith.constant 0 : index
    %c0_15 = arith.constant 0 : index
    %c0_16 = arith.constant 0 : index
    %6 = vector.load %arg4[%c0_12, %c0_13, %c0_14, %c0_15, %c0_16] : memref<4x1x1x1x128xf32, #tpu.memory_space<vmem>>, vector<1x1x1x1x128xf32>
    %7 = vector.shape_cast %6 : vector<1x1x1x1x128xf32> to vector<1x128xf32>
    %c1_17 = arith.constant 1 : index
    %c0_18 = arith.constant 0 : index
    %c0_19 = arith.constant 0 : index
    %c0_20 = arith.constant 0 : index
    %c0_21 = arith.constant 0 : index
    %8 = vector.load %arg4[%c1_17, %c0_18, %c0_19, %c0_20, %c0_21] : memref<4x1x1x1x128xf32, #tpu.memory_space<vmem>>, vector<1x1x1x1x128xf32>
    %9 = vector.shape_cast %8 : vector<1x1x1x1x128xf32> to vector<1x128xf32>
    %c2_22 = arith.constant 2 : index
    %c0_23 = arith.constant 0 : index
    %c0_24 = arith.constant 0 : index
    %c0_25 = arith.constant 0 : index
    %c0_26 = arith.constant 0 : index
    %10 = vector.load %arg4[%c2_22, %c0_23, %c0_24, %c0_25, %c0_26] : memref<4x1x1x1x128xf32, #tpu.memory_space<vmem>>, vector<1x1x1x1x128xf32>
    %11 = vector.shape_cast %10 : vector<1x1x1x1x128xf32> to vector<1x128xf32>
    %c3 = arith.constant 3 : index
    %c0_27 = arith.constant 0 : index
    %c0_28 = arith.constant 0 : index
    %c0_29 = arith.constant 0 : index
    %c0_30 = arith.constant 0 : index
    %12 = vector.load %arg4[%c3, %c0_27, %c0_28, %c0_29, %c0_30] : memref<4x1x1x1x128xf32, #tpu.memory_space<vmem>>, vector<1x1x1x1x128xf32>
    %13 = vector.shape_cast %12 : vector<1x1x1x1x128xf32> to vector<1x128xf32>
    %14 = arith.mulf %7, %9 : vector<1x128xf32>
    %15 = arith.subf %9, %14 : vector<1x128xf32>
    %cst = arith.constant 5.000000e-01 : f32
    %16 = vector.broadcast %cst : f32 to vector<1x128xf32>
    %17 = arith.cmpf ogt, %7, %16 : vector<1x128xf32>
    %cst_31 = arith.constant 1.000000e+00 : f32
    %18 = vector.broadcast %cst_31 : f32 to vector<1x128xf32>
    %19 = arith.subf %18, %1 : vector<1x128xf32>
    %20 = arith.select %17, %1, %19 : vector<1x128xi1>, vector<1x128xf32>
    %21 = math.log %20 : vector<1x128xf32>
    %cst_32 = arith.constant 0.000000e+00 : f32
    %22 = vector.broadcast %cst_32 : f32 to vector<1x128xf32>
    %23 = arith.subf %22, %21 : vector<1x128xf32>
    %cst_33 = arith.constant 1.000000e+02 : f32
    %24 = vector.broadcast %cst_33 : f32 to vector<1x128xf32>
    %25 = arith.minimumf %23, %24 : vector<1x128xf32>
    %26 = arith.mulf %25, %15 : vector<1x128xf32>
    %c0_34 = arith.constant 0 : index
    %c0_35 = arith.constant 0 : index
    %c0_36 = arith.constant 0 : index
    %c0_37 = arith.constant 0 : index
    %27 = vector.load %arg5[%c0_34, %c0_35, %c0_36, %c0_37] : memref<1x1x1x128xf32, #tpu.memory_space<vmem>>, vector<1x1x1x128xf32>
    %28 = vector.shape_cast %27 : vector<1x1x1x128xf32> to vector<1x128xf32>
    %29 = vector.shape_cast %26 : vector<1x128xf32> to vector<1x1x1x128xf32>
    tpu.vector_store %arg5[%c0_34, %c0_35, %c0_36, %c0_37], %29 {strides = array<i32>} : memref<1x1x1x128xf32, #tpu.memory_space<vmem>>, vector<1x1x1x128xf32>,
    %30 = arith.subf %3, %11 : vector<1x128xf32>
    %31 = math.absf %30 : vector<1x128xf32>
    %32 = arith.mulf %31, %13 : vector<1x128xf32>
    %33 = arith.mulf %5, %9 : vector<1x128xf32>
    %cst_38 = arith.constant dense<0.000000e+00> : vector<128xf32>
    %34 = vector.multi_reduction <add>, %14, %cst_38 [0] : vector<1x128xf32> to vector<128xf32>
    %35 = vector.shape_cast %34 : vector<128xf32> to vector<1x128xf32>
    %cst_39 = arith.constant dense<0.000000e+00> : vector<128xf32>
    %36 = vector.multi_reduction <add>, %9, %cst_39 [0] : vector<1x128xf32> to vector<128xf32>
    %37 = vector.shape_cast %36 : vector<128xf32> to vector<1x128xf32>
    %38 = arith.mulf %25, %14 : vector<1x128xf32>
    %cst_40 = arith.constant dense<0.000000e+00> : vector<128xf32>
    %39 = vector.multi_reduction <add>, %38, %cst_40 [0] : vector<1x128xf32> to vector<128xf32>
    %40 = vector.shape_cast %39 : vector<128xf32> to vector<1x128xf32>
    %cst_41 = arith.constant dense<0.000000e+00> : vector<128xf32>
    %41 = vector.multi_reduction <add>, %32, %cst_41 [0] : vector<1x128xf32> to vector<128xf32>
    %42 = vector.shape_cast %41 : vector<128xf32> to vector<1x128xf32>
    %cst_42 = arith.constant dense<0.000000e+00> : vector<128xf32>
    %43 = vector.multi_reduction <add>, %13, %cst_42 [0] : vector<1x128xf32> to vector<128xf32>
    %44 = vector.shape_cast %43 : vector<128xf32> to vector<1x128xf32>
    %45 = arith.mulf %33, %14 : vector<1x128xf32>
    %cst_43 = arith.constant dense<0.000000e+00> : vector<128xf32>
    %46 = vector.multi_reduction <add>, %45, %cst_43 [0] : vector<1x128xf32> to vector<128xf32>
    %47 = vector.shape_cast %46 : vector<128xf32> to vector<1x128xf32>
    %48 = arith.mulf %33, %33 : vector<1x128xf32>
    %cst_44 = arith.constant dense<0.000000e+00> : vector<128xf32>
    %49 = vector.multi_reduction <add>, %48, %cst_44 [0] : vector<1x128xf32> to vector<128xf32>
    %50 = vector.shape_cast %49 : vector<128xf32> to vector<1x128xf32>
    %cst_45 = arith.constant dense<0.000000e+00> : vector<128xf32>
    %51 = vector.multi_reduction <add>, %26, %cst_45 [0] : vector<1x128xf32> to vector<128xf32>
    %52 = vector.shape_cast %51 : vector<128xf32> to vector<1x128xf32>
    %53 = tpu.concatenate %35, %37, %40, %42, %44, %47, %50, %52 in 0 : vector<1x128xf32>, vector<1x128xf32>, vector<1x128xf32>, vector<1x128xf32>, vector<1x128xf32>, vector<1x128xf32>, vector<1x128xf32>, vector<1x128xf32> -> vector<8x128xf32>
    %c0_i32 = arith.constant 0 : i32
    %54 = arith.cmpi eq, %arg2, %c0_i32 : i32
    %55 = arith.extui %54 : i1 to i32
    %c0_i32_46 = arith.constant 0 : i32
    %56 = arith.cmpi ne, %55, %c0_i32_46 : i32
    scf.if %56 {
      %cst_55 = arith.constant 0.000000e+00 : f32
      %63 = vector.broadcast %cst_55 : f32 to vector<1x1x8x128xf32>
      %c0_56 = arith.constant 0 : index
      %c0_57 = arith.constant 0 : index
      %c0_58 = arith.constant 0 : index
      %c0_59 = arith.constant 0 : index
      %64 = vector.load %arg6[%c0_56, %c0_57, %c0_58, %c0_59] : memref<1x1x8x128xf32, #tpu.memory_space<vmem>>, vector<1x1x8x128xf32>
      tpu.vector_store %arg6[%c0_56, %c0_57, %c0_58, %c0_59], %63 {strides = array<i32>} : memref<1x1x8x128xf32, #tpu.memory_space<vmem>>, vector<1x1x8x128xf32>,
    } else {
    }
    %c0_47 = arith.constant 0 : index
    %c0_48 = arith.constant 0 : index
    %c0_49 = arith.constant 0 : index
    %c0_50 = arith.constant 0 : index
    %57 = vector.load %arg6[%c0_47, %c0_48, %c0_49, %c0_50] : memref<1x1x8x128xf32, #tpu.memory_space<vmem>>, vector<1x1x8x128xf32>
    %58 = vector.shape_cast %57 : vector<1x1x8x128xf32> to vector<8x128xf32>
    %59 = arith.addf %58, %53 : vector<8x128xf32>
    %c0_51 = arith.constant 0 : index
    %c0_52 = arith.constant 0 : index
    %c0_53 = arith.constant 0 : index
    %c0_54 = arith.constant 0 : index
    %60 = vector.load %arg6[%c0_51, %c0_52, %c0_53, %c0_54] : memref<1x1x8x128xf32, #tpu.memory_space<vmem>>, vector<1x1x8x128xf32>
    %61 = vector.shape_cast %60 : vector<1x1x8x128xf32> to vector<8x128xf32>
    %62 = vector.shape_cast %59 : vector<8x128xf32> to vector<1x1x8x128xf32>
    tpu.vector_store %arg6[%c0_51, %c0_52, %c0_53, %c0_54], %62 {strides = array<i32>} : memref<1x1x8x128xf32, #tpu.memory_space<vmem>>, vector<1x1x8x128xf32>,
    return
  }
  func.func @transform_0(%arg0: i32, %arg1: i32, %arg2: i32) -> (i32, i32, i32, i32, i32) {
    %c0_i32 = arith.constant 0 : i32
    %c0_i32_0 = arith.constant 0 : i32
    %c0_i32_1 = arith.constant 0 : i32
    return %arg0, %c0_i32, %arg1, %arg2, %c0_i32_0 : i32, i32, i32, i32, i32
  }
  func.func @transform_1(%arg0: i32, %arg1: i32, %arg2: i32) -> (i32, i32, i32, i32, i32) {
    %c0_i32 = arith.constant 0 : i32
    %c0_i32_0 = arith.constant 0 : i32
    %c0_i32_1 = arith.constant 0 : i32
    return %c0_i32, %arg0, %arg1, %arg2, %c0_i32_0 : i32, i32, i32, i32, i32
  }
  func.func @transform_2(%arg0: i32, %arg1: i32, %arg2: i32) -> (i32, i32, i32, i32) {
    %c0_i32 = arith.constant 0 : i32
    %c0_i32_0 = arith.constant 0 : i32
    return %arg0, %arg1, %arg2, %c0_i32 : i32, i32, i32, i32
  }
  func.func @transform_3(%arg0: i32, %arg1: i32, %arg2: i32) -> (i32, i32, i32, i32) {
    %c0_i32 = arith.constant 0 : i32
    %c0_i32_0 = arith.constant 0 : i32
    %c0_i32_1 = arith.constant 0 : i32
    return %arg0, %arg1, %c0_i32, %c0_i32_0 : i32, i32, i32, i32
  }
}

module attributes {stable_mosaic.version = 11 : i64} {
  func.func @_topk_search_kernel(%arg0: i32, %arg1: memref<16xf32, #tpu.memory_space<smem>>, %arg2: memref<4x128xf32, #tpu.memory_space<vmem>>, %arg3: memref<2x16x128xf32, #tpu.memory_space<vmem>>) attributes {dimension_semantics = [#tpu.dimension_semantics<arbitrary>], iteration_bounds = array<i64: 1>, scalar_prefetch = 0 : i64, scratch_operands = 0 : i64, tpu.core_type = #tpu.core_type<tc>, window_params = [{transform_indices = @transform_0, window_bounds = array<i64: 16>}, {transform_indices = @transform_1, window_bounds = array<i64: 4, 128>}, {pipeline_mode = #tpu.pipeline_mode<synchronous>, transform_indices = @transform_2, window_bounds = array<i64: 2, 16, 128>}]} {
    %c0 = arith.constant 0 : index
    %c0_0 = arith.constant 0 : index
    %0 = vector.load %arg2[%c0, %c0_0] : memref<4x128xf32, #tpu.memory_space<vmem>>, vector<4x128xf32>
    %c0_i32 = arith.constant 0 : i32
    %1 = arith.cmpi eq, %arg0, %c0_i32 : i32
    %2 = arith.extui %1 : i1 to i32
    %c0_i32_1 = arith.constant 0 : i32
    %3 = arith.cmpi ne, %2, %c0_i32_1 : i32
    scf.if %3 {
      %cst_56 = arith.constant 0.000000e+00 : f32
      %139 = vector.broadcast %cst_56 : f32 to vector<2x16x128xf32>
      %c0_57 = arith.constant 0 : index
      %c0_58 = arith.constant 0 : index
      %c0_59 = arith.constant 0 : index
      %140 = vector.load %arg3[%c0_57, %c0_58, %c0_59] : memref<2x16x128xf32, #tpu.memory_space<vmem>>, vector<2x16x128xf32>
      tpu.vector_store %arg3[%c0_57, %c0_58, %c0_59], %139 {strides = array<i32>} : memref<2x16x128xf32, #tpu.memory_space<vmem>>, vector<2x16x128xf32>,
    } else {
    }
    %c0_2 = arith.constant 0 : index
    %4 = memref.load %arg1[%c0_2] : memref<16xf32, #tpu.memory_space<smem>>
    %5 = vector.broadcast %4 : f32 to vector<4x128xf32>
    %6 = arith.cmpf oge, %0, %5 : vector<4x128xf32>
    %cst = arith.constant 1.000000e+00 : f32
    %cst_3 = arith.constant 0.000000e+00 : f32
    %7 = vector.broadcast %cst : f32 to vector<4x128xf32>
    %8 = vector.broadcast %cst_3 : f32 to vector<4x128xf32>
    %9 = arith.select %6, %7, %8 : vector<4x128xi1>, vector<4x128xf32>
    %cst_4 = arith.constant dense<0.000000e+00> : vector<128xf32>
    %10 = vector.multi_reduction <add>, %9, %cst_4 [0] : vector<4x128xf32> to vector<128xf32>
    %11 = vector.shape_cast %10 : vector<128xf32> to vector<1x128xf32>
    %c1 = arith.constant 1 : index
    %12 = memref.load %arg1[%c1] : memref<16xf32, #tpu.memory_space<smem>>
    %13 = vector.broadcast %12 : f32 to vector<4x128xf32>
    %14 = arith.cmpf oge, %0, %13 : vector<4x128xf32>
    %cst_5 = arith.constant 1.000000e+00 : f32
    %cst_6 = arith.constant 0.000000e+00 : f32
    %15 = vector.broadcast %cst_5 : f32 to vector<4x128xf32>
    %16 = vector.broadcast %cst_6 : f32 to vector<4x128xf32>
    %17 = arith.select %14, %15, %16 : vector<4x128xi1>, vector<4x128xf32>
    %cst_7 = arith.constant dense<0.000000e+00> : vector<128xf32>
    %18 = vector.multi_reduction <add>, %17, %cst_7 [0] : vector<4x128xf32> to vector<128xf32>
    %19 = vector.shape_cast %18 : vector<128xf32> to vector<1x128xf32>
    %c2 = arith.constant 2 : index
    %20 = memref.load %arg1[%c2] : memref<16xf32, #tpu.memory_space<smem>>
    %21 = vector.broadcast %20 : f32 to vector<4x128xf32>
    %22 = arith.cmpf oge, %0, %21 : vector<4x128xf32>
    %cst_8 = arith.constant 1.000000e+00 : f32
    %cst_9 = arith.constant 0.000000e+00 : f32
    %23 = vector.broadcast %cst_8 : f32 to vector<4x128xf32>
    %24 = vector.broadcast %cst_9 : f32 to vector<4x128xf32>
    %25 = arith.select %22, %23, %24 : vector<4x128xi1>, vector<4x128xf32>
    %cst_10 = arith.constant dense<0.000000e+00> : vector<128xf32>
    %26 = vector.multi_reduction <add>, %25, %cst_10 [0] : vector<4x128xf32> to vector<128xf32>
    %27 = vector.shape_cast %26 : vector<128xf32> to vector<1x128xf32>
    %c3 = arith.constant 3 : index
    %28 = memref.load %arg1[%c3] : memref<16xf32, #tpu.memory_space<smem>>
    %29 = vector.broadcast %28 : f32 to vector<4x128xf32>
    %30 = arith.cmpf oge, %0, %29 : vector<4x128xf32>
    %cst_11 = arith.constant 1.000000e+00 : f32
    %cst_12 = arith.constant 0.000000e+00 : f32
    %31 = vector.broadcast %cst_11 : f32 to vector<4x128xf32>
    %32 = vector.broadcast %cst_12 : f32 to vector<4x128xf32>
    %33 = arith.select %30, %31, %32 : vector<4x128xi1>, vector<4x128xf32>
    %cst_13 = arith.constant dense<0.000000e+00> : vector<128xf32>
    %34 = vector.multi_reduction <add>, %33, %cst_13 [0] : vector<4x128xf32> to vector<128xf32>
    %35 = vector.shape_cast %34 : vector<128xf32> to vector<1x128xf32>
    %c4 = arith.constant 4 : index
    %36 = memref.load %arg1[%c4] : memref<16xf32, #tpu.memory_space<smem>>
    %37 = vector.broadcast %36 : f32 to vector<4x128xf32>
    %38 = arith.cmpf oge, %0, %37 : vector<4x128xf32>
    %cst_14 = arith.constant 1.000000e+00 : f32
    %cst_15 = arith.constant 0.000000e+00 : f32
    %39 = vector.broadcast %cst_14 : f32 to vector<4x128xf32>
    %40 = vector.broadcast %cst_15 : f32 to vector<4x128xf32>
    %41 = arith.select %38, %39, %40 : vector<4x128xi1>, vector<4x128xf32>
    %cst_16 = arith.constant dense<0.000000e+00> : vector<128xf32>
    %42 = vector.multi_reduction <add>, %41, %cst_16 [0] : vector<4x128xf32> to vector<128xf32>
    %43 = vector.shape_cast %42 : vector<128xf32> to vector<1x128xf32>
    %c5 = arith.constant 5 : index
    %44 = memref.load %arg1[%c5] : memref<16xf32, #tpu.memory_space<smem>>
    %45 = vector.broadcast %44 : f32 to vector<4x128xf32>
    %46 = arith.cmpf oge, %0, %45 : vector<4x128xf32>
    %cst_17 = arith.constant 1.000000e+00 : f32
    %cst_18 = arith.constant 0.000000e+00 : f32
    %47 = vector.broadcast %cst_17 : f32 to vector<4x128xf32>
    %48 = vector.broadcast %cst_18 : f32 to vector<4x128xf32>
    %49 = arith.select %46, %47, %48 : vector<4x128xi1>, vector<4x128xf32>
    %cst_19 = arith.constant dense<0.000000e+00> : vector<128xf32>
    %50 = vector.multi_reduction <add>, %49, %cst_19 [0] : vector<4x128xf32> to vector<128xf32>
    %51 = vector.shape_cast %50 : vector<128xf32> to vector<1x128xf32>
    %c6 = arith.constant 6 : index
    %52 = memref.load %arg1[%c6] : memref<16xf32, #tpu.memory_space<smem>>
    %53 = vector.broadcast %52 : f32 to vector<4x128xf32>
    %54 = arith.cmpf oge, %0, %53 : vector<4x128xf32>
    %cst_20 = arith.constant 1.000000e+00 : f32
    %cst_21 = arith.constant 0.000000e+00 : f32
    %55 = vector.broadcast %cst_20 : f32 to vector<4x128xf32>
    %56 = vector.broadcast %cst_21 : f32 to vector<4x128xf32>
    %57 = arith.select %54, %55, %56 : vector<4x128xi1>, vector<4x128xf32>
    %cst_22 = arith.constant dense<0.000000e+00> : vector<128xf32>
    %58 = vector.multi_reduction <add>, %57, %cst_22 [0] : vector<4x128xf32> to vector<128xf32>
    %59 = vector.shape_cast %58 : vector<128xf32> to vector<1x128xf32>
    %c7 = arith.constant 7 : index
    %60 = memref.load %arg1[%c7] : memref<16xf32, #tpu.memory_space<smem>>
    %61 = vector.broadcast %60 : f32 to vector<4x128xf32>
    %62 = arith.cmpf oge, %0, %61 : vector<4x128xf32>
    %cst_23 = arith.constant 1.000000e+00 : f32
    %cst_24 = arith.constant 0.000000e+00 : f32
    %63 = vector.broadcast %cst_23 : f32 to vector<4x128xf32>
    %64 = vector.broadcast %cst_24 : f32 to vector<4x128xf32>
    %65 = arith.select %62, %63, %64 : vector<4x128xi1>, vector<4x128xf32>
    %cst_25 = arith.constant dense<0.000000e+00> : vector<128xf32>
    %66 = vector.multi_reduction <add>, %65, %cst_25 [0] : vector<4x128xf32> to vector<128xf32>
    %67 = vector.shape_cast %66 : vector<128xf32> to vector<1x128xf32>
    %c8 = arith.constant 8 : index
    %68 = memref.load %arg1[%c8] : memref<16xf32, #tpu.memory_space<smem>>
    %69 = vector.broadcast %68 : f32 to vector<4x128xf32>
    %70 = arith.cmpf oge, %0, %69 : vector<4x128xf32>
    %cst_26 = arith.constant 1.000000e+00 : f32
    %cst_27 = arith.constant 0.000000e+00 : f32
    %71 = vector.broadcast %cst_26 : f32 to vector<4x128xf32>
    %72 = vector.broadcast %cst_27 : f32 to vector<4x128xf32>
    %73 = arith.select %70, %71, %72 : vector<4x128xi1>, vector<4x128xf32>
    %cst_28 = arith.constant dense<0.000000e+00> : vector<128xf32>
    %74 = vector.multi_reduction <add>, %73, %cst_28 [0] : vector<4x128xf32> to vector<128xf32>
    %75 = vector.shape_cast %74 : vector<128xf32> to vector<1x128xf32>
    %c9 = arith.constant 9 : index
    %76 = memref.load %arg1[%c9] : memref<16xf32, #tpu.memory_space<smem>>
    %77 = vector.broadcast %76 : f32 to vector<4x128xf32>
    %78 = arith.cmpf oge, %0, %77 : vector<4x128xf32>
    %cst_29 = arith.constant 1.000000e+00 : f32
    %cst_30 = arith.constant 0.000000e+00 : f32
    %79 = vector.broadcast %cst_29 : f32 to vector<4x128xf32>
    %80 = vector.broadcast %cst_30 : f32 to vector<4x128xf32>
    %81 = arith.select %78, %79, %80 : vector<4x128xi1>, vector<4x128xf32>
    %cst_31 = arith.constant dense<0.000000e+00> : vector<128xf32>
    %82 = vector.multi_reduction <add>, %81, %cst_31 [0] : vector<4x128xf32> to vector<128xf32>
    %83 = vector.shape_cast %82 : vector<128xf32> to vector<1x128xf32>
    %c10 = arith.constant 10 : index
    %84 = memref.load %arg1[%c10] : memref<16xf32, #tpu.memory_space<smem>>
    %85 = vector.broadcast %84 : f32 to vector<4x128xf32>
    %86 = arith.cmpf oge, %0, %85 : vector<4x128xf32>
    %cst_32 = arith.constant 1.000000e+00 : f32
    %cst_33 = arith.constant 0.000000e+00 : f32
    %87 = vector.broadcast %cst_32 : f32 to vector<4x128xf32>
    %88 = vector.broadcast %cst_33 : f32 to vector<4x128xf32>
    %89 = arith.select %86, %87, %88 : vector<4x128xi1>, vector<4x128xf32>
    %cst_34 = arith.constant dense<0.000000e+00> : vector<128xf32>
    %90 = vector.multi_reduction <add>, %89, %cst_34 [0] : vector<4x128xf32> to vector<128xf32>
    %91 = vector.shape_cast %90 : vector<128xf32> to vector<1x128xf32>
    %c11 = arith.constant 11 : index
    %92 = memref.load %arg1[%c11] : memref<16xf32, #tpu.memory_space<smem>>
    %93 = vector.broadcast %92 : f32 to vector<4x128xf32>
    %94 = arith.cmpf oge, %0, %93 : vector<4x128xf32>
    %cst_35 = arith.constant 1.000000e+00 : f32
    %cst_36 = arith.constant 0.000000e+00 : f32
    %95 = vector.broadcast %cst_35 : f32 to vector<4x128xf32>
    %96 = vector.broadcast %cst_36 : f32 to vector<4x128xf32>
    %97 = arith.select %94, %95, %96 : vector<4x128xi1>, vector<4x128xf32>
    %cst_37 = arith.constant dense<0.000000e+00> : vector<128xf32>
    %98 = vector.multi_reduction <add>, %97, %cst_37 [0] : vector<4x128xf32> to vector<128xf32>
    %99 = vector.shape_cast %98 : vector<128xf32> to vector<1x128xf32>
    %c12 = arith.constant 12 : index
    %100 = memref.load %arg1[%c12] : memref<16xf32, #tpu.memory_space<smem>>
    %101 = vector.broadcast %100 : f32 to vector<4x128xf32>
    %102 = arith.cmpf oge, %0, %101 : vector<4x128xf32>
    %cst_38 = arith.constant 1.000000e+00 : f32
    %cst_39 = arith.constant 0.000000e+00 : f32
    %103 = vector.broadcast %cst_38 : f32 to vector<4x128xf32>
    %104 = vector.broadcast %cst_39 : f32 to vector<4x128xf32>
    %105 = arith.select %102, %103, %104 : vector<4x128xi1>, vector<4x128xf32>
    %cst_40 = arith.constant dense<0.000000e+00> : vector<128xf32>
    %106 = vector.multi_reduction <add>, %105, %cst_40 [0] : vector<4x128xf32> to vector<128xf32>
    %107 = vector.shape_cast %106 : vector<128xf32> to vector<1x128xf32>
    %c13 = arith.constant 13 : index
    %108 = memref.load %arg1[%c13] : memref<16xf32, #tpu.memory_space<smem>>
    %109 = vector.broadcast %108 : f32 to vector<4x128xf32>
    %110 = arith.cmpf oge, %0, %109 : vector<4x128xf32>
    %cst_41 = arith.constant 1.000000e+00 : f32
    %cst_42 = arith.constant 0.000000e+00 : f32
    %111 = vector.broadcast %cst_41 : f32 to vector<4x128xf32>
    %112 = vector.broadcast %cst_42 : f32 to vector<4x128xf32>
    %113 = arith.select %110, %111, %112 : vector<4x128xi1>, vector<4x128xf32>
    %cst_43 = arith.constant dense<0.000000e+00> : vector<128xf32>
    %114 = vector.multi_reduction <add>, %113, %cst_43 [0] : vector<4x128xf32> to vector<128xf32>
    %115 = vector.shape_cast %114 : vector<128xf32> to vector<1x128xf32>
    %c14 = arith.constant 14 : index
    %116 = memref.load %arg1[%c14] : memref<16xf32, #tpu.memory_space<smem>>
    %117 = vector.broadcast %116 : f32 to vector<4x128xf32>
    %118 = arith.cmpf oge, %0, %117 : vector<4x128xf32>
    %cst_44 = arith.constant 1.000000e+00 : f32
    %cst_45 = arith.constant 0.000000e+00 : f32
    %119 = vector.broadcast %cst_44 : f32 to vector<4x128xf32>
    %120 = vector.broadcast %cst_45 : f32 to vector<4x128xf32>
    %121 = arith.select %118, %119, %120 : vector<4x128xi1>, vector<4x128xf32>
    %cst_46 = arith.constant dense<0.000000e+00> : vector<128xf32>
    %122 = vector.multi_reduction <add>, %121, %cst_46 [0] : vector<4x128xf32> to vector<128xf32>
    %123 = vector.shape_cast %122 : vector<128xf32> to vector<1x128xf32>
    %c15 = arith.constant 15 : index
    %124 = memref.load %arg1[%c15] : memref<16xf32, #tpu.memory_space<smem>>
    %125 = vector.broadcast %124 : f32 to vector<4x128xf32>
    %126 = arith.cmpf oge, %0, %125 : vector<4x128xf32>
    %cst_47 = arith.constant 1.000000e+00 : f32
    %cst_48 = arith.constant 0.000000e+00 : f32
    %127 = vector.broadcast %cst_47 : f32 to vector<4x128xf32>
    %128 = vector.broadcast %cst_48 : f32 to vector<4x128xf32>
    %129 = arith.select %126, %127, %128 : vector<4x128xi1>, vector<4x128xf32>
    %cst_49 = arith.constant dense<0.000000e+00> : vector<128xf32>
    %130 = vector.multi_reduction <add>, %129, %cst_49 [0] : vector<4x128xf32> to vector<128xf32>
    %131 = vector.shape_cast %130 : vector<128xf32> to vector<1x128xf32>
    %c0_50 = arith.constant 0 : index
    %c0_51 = arith.constant 0 : index
    %c0_52 = arith.constant 0 : index
    %132 = vector.load %arg3[%c0_50, %c0_51, %c0_52] : memref<2x16x128xf32, #tpu.memory_space<vmem>>, vector<1x16x128xf32>
    %133 = vector.shape_cast %132 : vector<1x16x128xf32> to vector<16x128xf32>
    %134 = tpu.concatenate %11, %19, %27, %35, %43, %51, %59, %67, %75, %83, %91, %99, %107, %115, %123, %131 in 0 : vector<1x128xf32>, vector<1x128xf32>, vector<1x128xf32>, vector<1x128xf32>, vector<1x128xf32>, vector<1x128xf32>, vector<1x128xf32>, vector<1x128xf32>, vector<1x128xf32>, vector<1x128xf32>, vector<1x128xf32>, vector<1x128xf32>, vector<1x128xf32>, vector<1x128xf32>, vector<1x128xf32>, vector<1x128xf32> -> vector<16x128xf32>
    %135 = arith.addf %133, %134 : vector<16x128xf32>
    %c0_53 = arith.constant 0 : index
    %c0_54 = arith.constant 0 : index
    %c0_55 = arith.constant 0 : index
    %136 = vector.load %arg3[%c0_53, %c0_54, %c0_55] : memref<2x16x128xf32, #tpu.memory_space<vmem>>, vector<1x16x128xf32>
    %137 = vector.shape_cast %136 : vector<1x16x128xf32> to vector<16x128xf32>
    %138 = vector.shape_cast %135 : vector<16x128xf32> to vector<1x16x128xf32>
    tpu.vector_store %arg3[%c0_53, %c0_54, %c0_55], %138 {strides = array<i32>} : memref<2x16x128xf32, #tpu.memory_space<vmem>>, vector<1x16x128xf32>,
    return
  }
  func.func @transform_0(%arg0: i32) -> i32 {
    %c0_i32 = arith.constant 0 : i32
    %c0_i32_0 = arith.constant 0 : i32
    return %c0_i32 : i32
  }
  func.func @transform_1(%arg0: i32) -> (i32, i32) {
    %c0_i32 = arith.constant 0 : i32
    %c0_i32_0 = arith.constant 0 : i32
    return %arg0, %c0_i32 : i32, i32
  }
  func.func @transform_2(%arg0: i32) -> (i32, i32, i32) {
    %c0_i32 = arith.constant 0 : i32
    %c0_i32_0 = arith.constant 0 : i32
    %c0_i32_1 = arith.constant 0 : i32
    %c0_i32_2 = arith.constant 0 : i32
    return %c0_i32, %c0_i32_0, %c0_i32_1 : i32, i32, i32
  }
}

module attributes {stable_mosaic.version = 11 : i64} {
  func.func @_topk_search_kernel(%arg0: i32, %arg1: memref<16xf32, #tpu.memory_space<smem>>, %arg2: memref<4x128xf32, #tpu.memory_space<vmem>>, %arg3: memref<2x16x128xf32, #tpu.memory_space<vmem>>) attributes {dimension_semantics = [#tpu.dimension_semantics<arbitrary>], iteration_bounds = array<i64: 1>, scalar_prefetch = 0 : i64, scratch_operands = 0 : i64, tpu.core_type = #tpu.core_type<tc>, window_params = [{transform_indices = @transform_0, window_bounds = array<i64: 16>}, {transform_indices = @transform_1, window_bounds = array<i64: 4, 128>}, {pipeline_mode = #tpu.pipeline_mode<synchronous>, transform_indices = @transform_2, window_bounds = array<i64: 2, 16, 128>}]} {
    %c0 = arith.constant 0 : index
    %c0_0 = arith.constant 0 : index
    %0 = vector.load %arg2[%c0, %c0_0] : memref<4x128xf32, #tpu.memory_space<vmem>>, vector<4x128xf32>
    %c0_i32 = arith.constant 0 : i32
    %1 = arith.cmpi eq, %arg0, %c0_i32 : i32
    %2 = arith.extui %1 : i1 to i32
    %c0_i32_1 = arith.constant 0 : i32
    %3 = arith.cmpi ne, %2, %c0_i32_1 : i32
    scf.if %3 {
      %cst_94 = arith.constant 0.000000e+00 : f32
      %210 = vector.broadcast %cst_94 : f32 to vector<2x16x128xf32>
      %c0_95 = arith.constant 0 : index
      %c0_96 = arith.constant 0 : index
      %c0_97 = arith.constant 0 : index
      %211 = vector.load %arg3[%c0_95, %c0_96, %c0_97] : memref<2x16x128xf32, #tpu.memory_space<vmem>>, vector<2x16x128xf32>
      tpu.vector_store %arg3[%c0_95, %c0_96, %c0_97], %210 {strides = array<i32>} : memref<2x16x128xf32, #tpu.memory_space<vmem>>, vector<2x16x128xf32>,
    } else {
    }
    %c0_2 = arith.constant 0 : index
    %4 = memref.load %arg1[%c0_2] : memref<16xf32, #tpu.memory_space<smem>>
    %5 = vector.broadcast %4 : f32 to vector<4x128xf32>
    %6 = arith.cmpf oge, %0, %5 : vector<4x128xf32>
    %cst = arith.constant 1.000000e+00 : f32
    %cst_3 = arith.constant 0.000000e+00 : f32
    %7 = vector.broadcast %cst : f32 to vector<4x128xf32>
    %8 = vector.broadcast %cst_3 : f32 to vector<4x128xf32>
    %9 = arith.select %6, %7, %8 : vector<4x128xi1>, vector<4x128xf32>
    %cst_4 = arith.constant dense<0.000000e+00> : vector<128xf32>
    %10 = vector.multi_reduction <add>, %9, %cst_4 [0] : vector<4x128xf32> to vector<128xf32>
    %11 = vector.shape_cast %10 : vector<128xf32> to vector<1x128xf32>
    %cst_5 = arith.constant 0.000000e+00 : f32
    %12 = vector.broadcast %cst_5 : f32 to vector<4x128xf32>
    %13 = arith.select %6, %0, %12 : vector<4x128xi1>, vector<4x128xf32>
    %cst_6 = arith.constant dense<0.000000e+00> : vector<128xf32>
    %14 = vector.multi_reduction <add>, %13, %cst_6 [0] : vector<4x128xf32> to vector<128xf32>
    %15 = vector.shape_cast %14 : vector<128xf32> to vector<1x128xf32>
    %c1 = arith.constant 1 : index
    %16 = memref.load %arg1[%c1] : memref<16xf32, #tpu.memory_space<smem>>
    %17 = vector.broadcast %16 : f32 to vector<4x128xf32>
    %18 = arith.cmpf oge, %0, %17 : vector<4x128xf32>
    %cst_7 = arith.constant 1.000000e+00 : f32
    %cst_8 = arith.constant 0.000000e+00 : f32
    %19 = vector.broadcast %cst_7 : f32 to vector<4x128xf32>
    %20 = vector.broadcast %cst_8 : f32 to vector<4x128xf32>
    %21 = arith.select %18, %19, %20 : vector<4x128xi1>, vector<4x128xf32>
    %cst_9 = arith.constant dense<0.000000e+00> : vector<128xf32>
    %22 = vector.multi_reduction <add>, %21, %cst_9 [0] : vector<4x128xf32> to vector<128xf32>
    %23 = vector.shape_cast %22 : vector<128xf32> to vector<1x128xf32>
    %cst_10 = arith.constant 0.000000e+00 : f32
    %24 = vector.broadcast %cst_10 : f32 to vector<4x128xf32>
    %25 = arith.select %18, %0, %24 : vector<4x128xi1>, vector<4x128xf32>
    %cst_11 = arith.constant dense<0.000000e+00> : vector<128xf32>
    %26 = vector.multi_reduction <add>, %25, %cst_11 [0] : vector<4x128xf32> to vector<128xf32>
    %27 = vector.shape_cast %26 : vector<128xf32> to vector<1x128xf32>
    %c2 = arith.constant 2 : index
    %28 = memref.load %arg1[%c2] : memref<16xf32, #tpu.memory_space<smem>>
    %29 = vector.broadcast %28 : f32 to vector<4x128xf32>
    %30 = arith.cmpf oge, %0, %29 : vector<4x128xf32>
    %cst_12 = arith.constant 1.000000e+00 : f32
    %cst_13 = arith.constant 0.000000e+00 : f32
    %31 = vector.broadcast %cst_12 : f32 to vector<4x128xf32>
    %32 = vector.broadcast %cst_13 : f32 to vector<4x128xf32>
    %33 = arith.select %30, %31, %32 : vector<4x128xi1>, vector<4x128xf32>
    %cst_14 = arith.constant dense<0.000000e+00> : vector<128xf32>
    %34 = vector.multi_reduction <add>, %33, %cst_14 [0] : vector<4x128xf32> to vector<128xf32>
    %35 = vector.shape_cast %34 : vector<128xf32> to vector<1x128xf32>
    %cst_15 = arith.constant 0.000000e+00 : f32
    %36 = vector.broadcast %cst_15 : f32 to vector<4x128xf32>
    %37 = arith.select %30, %0, %36 : vector<4x128xi1>, vector<4x128xf32>
    %cst_16 = arith.constant dense<0.000000e+00> : vector<128xf32>
    %38 = vector.multi_reduction <add>, %37, %cst_16 [0] : vector<4x128xf32> to vector<128xf32>
    %39 = vector.shape_cast %38 : vector<128xf32> to vector<1x128xf32>
    %c3 = arith.constant 3 : index
    %40 = memref.load %arg1[%c3] : memref<16xf32, #tpu.memory_space<smem>>
    %41 = vector.broadcast %40 : f32 to vector<4x128xf32>
    %42 = arith.cmpf oge, %0, %41 : vector<4x128xf32>
    %cst_17 = arith.constant 1.000000e+00 : f32
    %cst_18 = arith.constant 0.000000e+00 : f32
    %43 = vector.broadcast %cst_17 : f32 to vector<4x128xf32>
    %44 = vector.broadcast %cst_18 : f32 to vector<4x128xf32>
    %45 = arith.select %42, %43, %44 : vector<4x128xi1>, vector<4x128xf32>
    %cst_19 = arith.constant dense<0.000000e+00> : vector<128xf32>
    %46 = vector.multi_reduction <add>, %45, %cst_19 [0] : vector<4x128xf32> to vector<128xf32>
    %47 = vector.shape_cast %46 : vector<128xf32> to vector<1x128xf32>
    %cst_20 = arith.constant 0.000000e+00 : f32
    %48 = vector.broadcast %cst_20 : f32 to vector<4x128xf32>
    %49 = arith.select %42, %0, %48 : vector<4x128xi1>, vector<4x128xf32>
    %cst_21 = arith.constant dense<0.000000e+00> : vector<128xf32>
    %50 = vector.multi_reduction <add>, %49, %cst_21 [0] : vector<4x128xf32> to vector<128xf32>
    %51 = vector.shape_cast %50 : vector<128xf32> to vector<1x128xf32>
    %c4 = arith.constant 4 : index
    %52 = memref.load %arg1[%c4] : memref<16xf32, #tpu.memory_space<smem>>
    %53 = vector.broadcast %52 : f32 to vector<4x128xf32>
    %54 = arith.cmpf oge, %0, %53 : vector<4x128xf32>
    %cst_22 = arith.constant 1.000000e+00 : f32
    %cst_23 = arith.constant 0.000000e+00 : f32
    %55 = vector.broadcast %cst_22 : f32 to vector<4x128xf32>
    %56 = vector.broadcast %cst_23 : f32 to vector<4x128xf32>
    %57 = arith.select %54, %55, %56 : vector<4x128xi1>, vector<4x128xf32>
    %cst_24 = arith.constant dense<0.000000e+00> : vector<128xf32>
    %58 = vector.multi_reduction <add>, %57, %cst_24 [0] : vector<4x128xf32> to vector<128xf32>
    %59 = vector.shape_cast %58 : vector<128xf32> to vector<1x128xf32>
    %cst_25 = arith.constant 0.000000e+00 : f32
    %60 = vector.broadcast %cst_25 : f32 to vector<4x128xf32>
    %61 = arith.select %54, %0, %60 : vector<4x128xi1>, vector<4x128xf32>
    %cst_26 = arith.constant dense<0.000000e+00> : vector<128xf32>
    %62 = vector.multi_reduction <add>, %61, %cst_26 [0] : vector<4x128xf32> to vector<128xf32>
    %63 = vector.shape_cast %62 : vector<128xf32> to vector<1x128xf32>
    %c5 = arith.constant 5 : index
    %64 = memref.load %arg1[%c5] : memref<16xf32, #tpu.memory_space<smem>>
    %65 = vector.broadcast %64 : f32 to vector<4x128xf32>
    %66 = arith.cmpf oge, %0, %65 : vector<4x128xf32>
    %cst_27 = arith.constant 1.000000e+00 : f32
    %cst_28 = arith.constant 0.000000e+00 : f32
    %67 = vector.broadcast %cst_27 : f32 to vector<4x128xf32>
    %68 = vector.broadcast %cst_28 : f32 to vector<4x128xf32>
    %69 = arith.select %66, %67, %68 : vector<4x128xi1>, vector<4x128xf32>
    %cst_29 = arith.constant dense<0.000000e+00> : vector<128xf32>
    %70 = vector.multi_reduction <add>, %69, %cst_29 [0] : vector<4x128xf32> to vector<128xf32>
    %71 = vector.shape_cast %70 : vector<128xf32> to vector<1x128xf32>
    %cst_30 = arith.constant 0.000000e+00 : f32
    %72 = vector.broadcast %cst_30 : f32 to vector<4x128xf32>
    %73 = arith.select %66, %0, %72 : vector<4x128xi1>, vector<4x128xf32>
    %cst_31 = arith.constant dense<0.000000e+00> : vector<128xf32>
    %74 = vector.multi_reduction <add>, %73, %cst_31 [0] : vector<4x128xf32> to vector<128xf32>
    %75 = vector.shape_cast %74 : vector<128xf32> to vector<1x128xf32>
    %c6 = arith.constant 6 : index
    %76 = memref.load %arg1[%c6] : memref<16xf32, #tpu.memory_space<smem>>
    %77 = vector.broadcast %76 : f32 to vector<4x128xf32>
    %78 = arith.cmpf oge, %0, %77 : vector<4x128xf32>
    %cst_32 = arith.constant 1.000000e+00 : f32
    %cst_33 = arith.constant 0.000000e+00 : f32
    %79 = vector.broadcast %cst_32 : f32 to vector<4x128xf32>
    %80 = vector.broadcast %cst_33 : f32 to vector<4x128xf32>
    %81 = arith.select %78, %79, %80 : vector<4x128xi1>, vector<4x128xf32>
    %cst_34 = arith.constant dense<0.000000e+00> : vector<128xf32>
    %82 = vector.multi_reduction <add>, %81, %cst_34 [0] : vector<4x128xf32> to vector<128xf32>
    %83 = vector.shape_cast %82 : vector<128xf32> to vector<1x128xf32>
    %cst_35 = arith.constant 0.000000e+00 : f32
    %84 = vector.broadcast %cst_35 : f32 to vector<4x128xf32>
    %85 = arith.select %78, %0, %84 : vector<4x128xi1>, vector<4x128xf32>
    %cst_36 = arith.constant dense<0.000000e+00> : vector<128xf32>
    %86 = vector.multi_reduction <add>, %85, %cst_36 [0] : vector<4x128xf32> to vector<128xf32>
    %87 = vector.shape_cast %86 : vector<128xf32> to vector<1x128xf32>
    %c7 = arith.constant 7 : index
    %88 = memref.load %arg1[%c7] : memref<16xf32, #tpu.memory_space<smem>>
    %89 = vector.broadcast %88 : f32 to vector<4x128xf32>
    %90 = arith.cmpf oge, %0, %89 : vector<4x128xf32>
    %cst_37 = arith.constant 1.000000e+00 : f32
    %cst_38 = arith.constant 0.000000e+00 : f32
    %91 = vector.broadcast %cst_37 : f32 to vector<4x128xf32>
    %92 = vector.broadcast %cst_38 : f32 to vector<4x128xf32>
    %93 = arith.select %90, %91, %92 : vector<4x128xi1>, vector<4x128xf32>
    %cst_39 = arith.constant dense<0.000000e+00> : vector<128xf32>
    %94 = vector.multi_reduction <add>, %93, %cst_39 [0] : vector<4x128xf32> to vector<128xf32>
    %95 = vector.shape_cast %94 : vector<128xf32> to vector<1x128xf32>
    %cst_40 = arith.constant 0.000000e+00 : f32
    %96 = vector.broadcast %cst_40 : f32 to vector<4x128xf32>
    %97 = arith.select %90, %0, %96 : vector<4x128xi1>, vector<4x128xf32>
    %cst_41 = arith.constant dense<0.000000e+00> : vector<128xf32>
    %98 = vector.multi_reduction <add>, %97, %cst_41 [0] : vector<4x128xf32> to vector<128xf32>
    %99 = vector.shape_cast %98 : vector<128xf32> to vector<1x128xf32>
    %c8 = arith.constant 8 : index
    %100 = memref.load %arg1[%c8] : memref<16xf32, #tpu.memory_space<smem>>
    %101 = vector.broadcast %100 : f32 to vector<4x128xf32>
    %102 = arith.cmpf oge, %0, %101 : vector<4x128xf32>
    %cst_42 = arith.constant 1.000000e+00 : f32
    %cst_43 = arith.constant 0.000000e+00 : f32
    %103 = vector.broadcast %cst_42 : f32 to vector<4x128xf32>
    %104 = vector.broadcast %cst_43 : f32 to vector<4x128xf32>
    %105 = arith.select %102, %103, %104 : vector<4x128xi1>, vector<4x128xf32>
    %cst_44 = arith.constant dense<0.000000e+00> : vector<128xf32>
    %106 = vector.multi_reduction <add>, %105, %cst_44 [0] : vector<4x128xf32> to vector<128xf32>
    %107 = vector.shape_cast %106 : vector<128xf32> to vector<1x128xf32>
    %cst_45 = arith.constant 0.000000e+00 : f32
    %108 = vector.broadcast %cst_45 : f32 to vector<4x128xf32>
    %109 = arith.select %102, %0, %108 : vector<4x128xi1>, vector<4x128xf32>
    %cst_46 = arith.constant dense<0.000000e+00> : vector<128xf32>
    %110 = vector.multi_reduction <add>, %109, %cst_46 [0] : vector<4x128xf32> to vector<128xf32>
    %111 = vector.shape_cast %110 : vector<128xf32> to vector<1x128xf32>
    %c9 = arith.constant 9 : index
    %112 = memref.load %arg1[%c9] : memref<16xf32, #tpu.memory_space<smem>>
    %113 = vector.broadcast %112 : f32 to vector<4x128xf32>
    %114 = arith.cmpf oge, %0, %113 : vector<4x128xf32>
    %cst_47 = arith.constant 1.000000e+00 : f32
    %cst_48 = arith.constant 0.000000e+00 : f32
    %115 = vector.broadcast %cst_47 : f32 to vector<4x128xf32>
    %116 = vector.broadcast %cst_48 : f32 to vector<4x128xf32>
    %117 = arith.select %114, %115, %116 : vector<4x128xi1>, vector<4x128xf32>
    %cst_49 = arith.constant dense<0.000000e+00> : vector<128xf32>
    %118 = vector.multi_reduction <add>, %117, %cst_49 [0] : vector<4x128xf32> to vector<128xf32>
    %119 = vector.shape_cast %118 : vector<128xf32> to vector<1x128xf32>
    %cst_50 = arith.constant 0.000000e+00 : f32
    %120 = vector.broadcast %cst_50 : f32 to vector<4x128xf32>
    %121 = arith.select %114, %0, %120 : vector<4x128xi1>, vector<4x128xf32>
    %cst_51 = arith.constant dense<0.000000e+00> : vector<128xf32>
    %122 = vector.multi_reduction <add>, %121, %cst_51 [0] : vector<4x128xf32> to vector<128xf32>
    %123 = vector.shape_cast %122 : vector<128xf32> to vector<1x128xf32>
    %c10 = arith.constant 10 : index
    %124 = memref.load %arg1[%c10] : memref<16xf32, #tpu.memory_space<smem>>
    %125 = vector.broadcast %124 : f32 to vector<4x128xf32>
    %126 = arith.cmpf oge, %0, %125 : vector<4x128xf32>
    %cst_52 = arith.constant 1.000000e+00 : f32
    %cst_53 = arith.constant 0.000000e+00 : f32
    %127 = vector.broadcast %cst_52 : f32 to vector<4x128xf32>
    %128 = vector.broadcast %cst_53 : f32 to vector<4x128xf32>
    %129 = arith.select %126, %127, %128 : vector<4x128xi1>, vector<4x128xf32>
    %cst_54 = arith.constant dense<0.000000e+00> : vector<128xf32>
    %130 = vector.multi_reduction <add>, %129, %cst_54 [0] : vector<4x128xf32> to vector<128xf32>
    %131 = vector.shape_cast %130 : vector<128xf32> to vector<1x128xf32>
    %cst_55 = arith.constant 0.000000e+00 : f32
    %132 = vector.broadcast %cst_55 : f32 to vector<4x128xf32>
    %133 = arith.select %126, %0, %132 : vector<4x128xi1>, vector<4x128xf32>
    %cst_56 = arith.constant dense<0.000000e+00> : vector<128xf32>
    %134 = vector.multi_reduction <add>, %133, %cst_56 [0] : vector<4x128xf32> to vector<128xf32>
    %135 = vector.shape_cast %134 : vector<128xf32> to vector<1x128xf32>
    %c11 = arith.constant 11 : index
    %136 = memref.load %arg1[%c11] : memref<16xf32, #tpu.memory_space<smem>>
    %137 = vector.broadcast %136 : f32 to vector<4x128xf32>
    %138 = arith.cmpf oge, %0, %137 : vector<4x128xf32>
    %cst_57 = arith.constant 1.000000e+00 : f32
    %cst_58 = arith.constant 0.000000e+00 : f32
    %139 = vector.broadcast %cst_57 : f32 to vector<4x128xf32>
    %140 = vector.broadcast %cst_58 : f32 to vector<4x128xf32>
    %141 = arith.select %138, %139, %140 : vector<4x128xi1>, vector<4x128xf32>
    %cst_59 = arith.constant dense<0.000000e+00> : vector<128xf32>
    %142 = vector.multi_reduction <add>, %141, %cst_59 [0] : vector<4x128xf32> to vector<128xf32>
    %143 = vector.shape_cast %142 : vector<128xf32> to vector<1x128xf32>
    %cst_60 = arith.constant 0.000000e+00 : f32
    %144 = vector.broadcast %cst_60 : f32 to vector<4x128xf32>
    %145 = arith.select %138, %0, %144 : vector<4x128xi1>, vector<4x128xf32>
    %cst_61 = arith.constant dense<0.000000e+00> : vector<128xf32>
    %146 = vector.multi_reduction <add>, %145, %cst_61 [0] : vector<4x128xf32> to vector<128xf32>
    %147 = vector.shape_cast %146 : vector<128xf32> to vector<1x128xf32>
    %c12 = arith.constant 12 : index
    %148 = memref.load %arg1[%c12] : memref<16xf32, #tpu.memory_space<smem>>
    %149 = vector.broadcast %148 : f32 to vector<4x128xf32>
    %150 = arith.cmpf oge, %0, %149 : vector<4x128xf32>
    %cst_62 = arith.constant 1.000000e+00 : f32
    %cst_63 = arith.constant 0.000000e+00 : f32
    %151 = vector.broadcast %cst_62 : f32 to vector<4x128xf32>
    %152 = vector.broadcast %cst_63 : f32 to vector<4x128xf32>
    %153 = arith.select %150, %151, %152 : vector<4x128xi1>, vector<4x128xf32>
    %cst_64 = arith.constant dense<0.000000e+00> : vector<128xf32>
    %154 = vector.multi_reduction <add>, %153, %cst_64 [0] : vector<4x128xf32> to vector<128xf32>
    %155 = vector.shape_cast %154 : vector<128xf32> to vector<1x128xf32>
    %cst_65 = arith.constant 0.000000e+00 : f32
    %156 = vector.broadcast %cst_65 : f32 to vector<4x128xf32>
    %157 = arith.select %150, %0, %156 : vector<4x128xi1>, vector<4x128xf32>
    %cst_66 = arith.constant dense<0.000000e+00> : vector<128xf32>
    %158 = vector.multi_reduction <add>, %157, %cst_66 [0] : vector<4x128xf32> to vector<128xf32>
    %159 = vector.shape_cast %158 : vector<128xf32> to vector<1x128xf32>
    %c13 = arith.constant 13 : index
    %160 = memref.load %arg1[%c13] : memref<16xf32, #tpu.memory_space<smem>>
    %161 = vector.broadcast %160 : f32 to vector<4x128xf32>
    %162 = arith.cmpf oge, %0, %161 : vector<4x128xf32>
    %cst_67 = arith.constant 1.000000e+00 : f32
    %cst_68 = arith.constant 0.000000e+00 : f32
    %163 = vector.broadcast %cst_67 : f32 to vector<4x128xf32>
    %164 = vector.broadcast %cst_68 : f32 to vector<4x128xf32>
    %165 = arith.select %162, %163, %164 : vector<4x128xi1>, vector<4x128xf32>
    %cst_69 = arith.constant dense<0.000000e+00> : vector<128xf32>
    %166 = vector.multi_reduction <add>, %165, %cst_69 [0] : vector<4x128xf32> to vector<128xf32>
    %167 = vector.shape_cast %166 : vector<128xf32> to vector<1x128xf32>
    %cst_70 = arith.constant 0.000000e+00 : f32
    %168 = vector.broadcast %cst_70 : f32 to vector<4x128xf32>
    %169 = arith.select %162, %0, %168 : vector<4x128xi1>, vector<4x128xf32>
    %cst_71 = arith.constant dense<0.000000e+00> : vector<128xf32>
    %170 = vector.multi_reduction <add>, %169, %cst_71 [0] : vector<4x128xf32> to vector<128xf32>
    %171 = vector.shape_cast %170 : vector<128xf32> to vector<1x128xf32>
    %c14 = arith.constant 14 : index
    %172 = memref.load %arg1[%c14] : memref<16xf32, #tpu.memory_space<smem>>
    %173 = vector.broadcast %172 : f32 to vector<4x128xf32>
    %174 = arith.cmpf oge, %0, %173 : vector<4x128xf32>
    %cst_72 = arith.constant 1.000000e+00 : f32
    %cst_73 = arith.constant 0.000000e+00 : f32
    %175 = vector.broadcast %cst_72 : f32 to vector<4x128xf32>
    %176 = vector.broadcast %cst_73 : f32 to vector<4x128xf32>
    %177 = arith.select %174, %175, %176 : vector<4x128xi1>, vector<4x128xf32>
    %cst_74 = arith.constant dense<0.000000e+00> : vector<128xf32>
    %178 = vector.multi_reduction <add>, %177, %cst_74 [0] : vector<4x128xf32> to vector<128xf32>
    %179 = vector.shape_cast %178 : vector<128xf32> to vector<1x128xf32>
    %cst_75 = arith.constant 0.000000e+00 : f32
    %180 = vector.broadcast %cst_75 : f32 to vector<4x128xf32>
    %181 = arith.select %174, %0, %180 : vector<4x128xi1>, vector<4x128xf32>
    %cst_76 = arith.constant dense<0.000000e+00> : vector<128xf32>
    %182 = vector.multi_reduction <add>, %181, %cst_76 [0] : vector<4x128xf32> to vector<128xf32>
    %183 = vector.shape_cast %182 : vector<128xf32> to vector<1x128xf32>
    %c15 = arith.constant 15 : index
    %184 = memref.load %arg1[%c15] : memref<16xf32, #tpu.memory_space<smem>>
    %185 = vector.broadcast %184 : f32 to vector<4x128xf32>
    %186 = arith.cmpf oge, %0, %185 : vector<4x128xf32>
    %cst_77 = arith.constant 1.000000e+00 : f32
    %cst_78 = arith.constant 0.000000e+00 : f32
    %187 = vector.broadcast %cst_77 : f32 to vector<4x128xf32>
    %188 = vector.broadcast %cst_78 : f32 to vector<4x128xf32>
    %189 = arith.select %186, %187, %188 : vector<4x128xi1>, vector<4x128xf32>
    %cst_79 = arith.constant dense<0.000000e+00> : vector<128xf32>
    %190 = vector.multi_reduction <add>, %189, %cst_79 [0] : vector<4x128xf32> to vector<128xf32>
    %191 = vector.shape_cast %190 : vector<128xf32> to vector<1x128xf32>
    %cst_80 = arith.constant 0.000000e+00 : f32
    %192 = vector.broadcast %cst_80 : f32 to vector<4x128xf32>
    %193 = arith.select %186, %0, %192 : vector<4x128xi1>, vector<4x128xf32>
    %cst_81 = arith.constant dense<0.000000e+00> : vector<128xf32>
    %194 = vector.multi_reduction <add>, %193, %cst_81 [0] : vector<4x128xf32> to vector<128xf32>
    %195 = vector.shape_cast %194 : vector<128xf32> to vector<1x128xf32>
    %c0_82 = arith.constant 0 : index
    %c0_83 = arith.constant 0 : index
    %c0_84 = arith.constant 0 : index
    %196 = vector.load %arg3[%c0_82, %c0_83, %c0_84] : memref<2x16x128xf32, #tpu.memory_space<vmem>>, vector<1x16x128xf32>
    %197 = vector.shape_cast %196 : vector<1x16x128xf32> to vector<16x128xf32>
    %198 = tpu.concatenate %11, %23, %35, %47, %59, %71, %83, %95, %107, %119, %131, %143, %155, %167, %179, %191 in 0 : vector<1x128xf32>, vector<1x128xf32>, vector<1x128xf32>, vector<1x128xf32>, vector<1x128xf32>, vector<1x128xf32>, vector<1x128xf32>, vector<1x128xf32>, vector<1x128xf32>, vector<1x128xf32>, vector<1x128xf32>, vector<1x128xf32>, vector<1x128xf32>, vector<1x128xf32>, vector<1x128xf32>, vector<1x128xf32> -> vector<16x128xf32>
    %199 = arith.addf %197, %198 : vector<16x128xf32>
    %c0_85 = arith.constant 0 : index
    %c0_86 = arith.constant 0 : index
    %c0_87 = arith.constant 0 : index
    %200 = vector.load %arg3[%c0_85, %c0_86, %c0_87] : memref<2x16x128xf32, #tpu.memory_space<vmem>>, vector<1x16x128xf32>
    %201 = vector.shape_cast %200 : vector<1x16x128xf32> to vector<16x128xf32>
    %202 = vector.shape_cast %199 : vector<16x128xf32> to vector<1x16x128xf32>
    tpu.vector_store %arg3[%c0_85, %c0_86, %c0_87], %202 {strides = array<i32>} : memref<2x16x128xf32, #tpu.memory_space<vmem>>, vector<1x16x128xf32>,
    %c1_88 = arith.constant 1 : index
    %c0_89 = arith.constant 0 : index
    %c0_90 = arith.constant 0 : index
    %203 = vector.load %arg3[%c1_88, %c0_89, %c0_90] : memref<2x16x128xf32, #tpu.memory_space<vmem>>, vector<1x16x128xf32>
    %204 = vector.shape_cast %203 : vector<1x16x128xf32> to vector<16x128xf32>
    %205 = tpu.concatenate %15, %27, %39, %51, %63, %75, %87, %99, %111, %123, %135, %147, %159, %171, %183, %195 in 0 : vector<1x128xf32>, vector<1x128xf32>, vector<1x128xf32>, vector<1x128xf32>, vector<1x128xf32>, vector<1x128xf32>, vector<1x128xf32>, vector<1x128xf32>, vector<1x128xf32>, vector<1x128xf32>, vector<1x128xf32>, vector<1x128xf32>, vector<1x128xf32>, vector<1x128xf32>, vector<1x128xf32>, vector<1x128xf32> -> vector<16x128xf32>
    %206 = arith.addf %204, %205 : vector<16x128xf32>
    %c1_91 = arith.constant 1 : index
    %c0_92 = arith.constant 0 : index
    %c0_93 = arith.constant 0 : index
    %207 = vector.load %arg3[%c1_91, %c0_92, %c0_93] : memref<2x16x128xf32, #tpu.memory_space<vmem>>, vector<1x16x128xf32>
    %208 = vector.shape_cast %207 : vector<1x16x128xf32> to vector<16x128xf32>
    %209 = vector.shape_cast %206 : vector<16x128xf32> to vector<1x16x128xf32>
    tpu.vector_store %arg3[%c1_91, %c0_92, %c0_93], %209 {strides = array<i32>} : memref<2x16x128xf32, #tpu.memory_space<vmem>>, vector<1x16x128xf32>,
    return
  }
  func.func @transform_0(%arg0: i32) -> i32 {
    %c0_i32 = arith.constant 0 : i32
    %c0_i32_0 = arith.constant 0 : i32
    return %c0_i32 : i32
  }
  func.func @transform_1(%arg0: i32) -> (i32, i32) {
    %c0_i32 = arith.constant 0 : i32
    %c0_i32_0 = arith.constant 0 : i32
    return %arg0, %c0_i32 : i32, i32
  }
  func.func @transform_2(%arg0: i32) -> (i32, i32, i32) {
    %c0_i32 = arith.constant 0 : i32
    %c0_i32_0 = arith.constant 0 : i32
    %c0_i32_1 = arith.constant 0 : i32
    %c0_i32_2 = arith.constant 0 : i32
    return %c0_i32, %c0_i32_0, %c0_i32_1 : i32, i32, i32
  }
}

</mosaic_0001>

<llo_original>
// kernel: db_loss.5
$region0: #{db_loss.5}
  #allocation0 [shape = 'u32[]', space=smem, size = 0x4, offset = 0x4, fixed_abs, tag = 'smem constant byte address 0x4 - core index']
  #allocation1 [shape = 'u32[144,128]{1,0:T(1,128)}', space=vmem, size = 0x12000, scoped, tag = 'internal scratch']
  %s0 = inlined_call_operand.vmem [shape: f32[2,3,2,1,128], index: 0, kind: input, shape index: {}]
  %s1 = inlined_call_operand.vmem [shape: f32[4,2,2,1,128], index: 1, kind: input, shape index: {}]
  %s2 = inlined_call_operand.vmem [shape: f32[2,2,1,128], index: 2, kind: output, shape index: {0}]
  %s3 = inlined_call_operand.vmem [shape: f32[2,2,8,128], index: 3, kind: output, shape index: {1}]
  %4 = xla_tuple %s2, %s3
  %s5 = sld [smem:[#allocation0]]
  $region121: #{db_loss.5} parent=0
    _
  %s7 = ssub.s32 1, %s5
  %s8 = scalar_select 0, %s7, %s5
  $region1: #{db_loss.5} parent=0
    #allocation2 [shape = 'u8[3072]{0}', space=vmem, size = 0xc00, scoped, tag = 'input window, operand 0']
    #allocation3 [shape = 'u8[4096]{0}', space=vmem, size = 0x1000, scoped, tag = 'input window, operand 1']
    loop: start=0, step=1, limit=6
    $region2: #{db_loss.5} parent=1 // loop_pre_header
      _
    $region3: #{db_loss.5} parent=1 // loop_header
      %s10 = sphi 0, %s14
      %p11 = scmp.ge.s32.totalorder %s10, 6
      %s17 = sphi 0, %s36
      %s18 = sphi 0, %s32
      %s19 = sphi 0, %s28
      %s20 = sphi 0, %s17
      %s21 = sphi 0, %s18
      %s22 = sphi 0, %s19
      %s23 = sphi 0, %s20
      %s24 = sphi 0, %s21
      %s25 = sphi 0, %s22
      %s43 = sphi 0, %s45
      %s46 = sphi 0, %s43
      %s47 = sphi 0, %s46
      %s63 = sphi 0, %s47
      %s73 = sphi 0, %s75
      %s76 = sphi 0, %s73
      %s77 = sphi 0, %s76
      %s93 = sphi 0, %s77
      %s103 = sphi 0, %s105
      %s106 = sphi 0, %s103
      %s107 = sphi 0, %s106
      %s123 = sphi 0, %s107
      %s131 = sphi 0, %s133
      %s134 = sphi 0, %s131
      %s135 = sphi 0, %s134
      %s151 = sphi 0, %s135
    $region4: #{db_loss.5} parent=1 // loop_header_branch
      %13 = sbr.rel (%p11) target = $region8
    $region5: #{db_loss.5} parent=1 // loop_body
      %s15 = ssub.s32 %s10, 1
      %s16 = ssub.s32 %s10, 2
      %s26 = sadd.s32 1, %s19
      %p27 = scmp.ge.s32.totalorder %s26, 1
      %s28 = scalar_select %p27, 0, %s26
      %s29 = sadd.s32 1, %s18
      %s30 = scalar_select %p27, %s29, %s18
      %p31 = scmp.ge.s32.totalorder %s30, 2
      %s32 = scalar_select %p31, 0, %s30
      %s33 = sadd.s32 1, %s17
      %s34 = scalar_select %p31, %s33, %s17
      %p35 = scmp.ge.s32.totalorder %s34, 2
      %s36 = scalar_select %p35, 0, %s34
      %s37 = ssub.s32 %s17, %s36
      %s38 = ssub.s32 %s18, %s32
      %s39 = sor.u32 %s37, %s38
      %s40 = ssub.s32 %s19, %s28
      %s41 = sor.u32 %s39, %s40
      %p42 = scmp.eq.s32.totalorder %s41, 0
      %s44 = sadd.s32 %s43, 1
      %s45 = scalar_select %p42, %s43, %s44
      %p48 = pneg %p42
      %p49 = scmp.eq.s32.totalorder %s10, 3
      %p50 = por %p48, %p49
      %p51 = scmp.ne.s32.totalorder %s43, %s46
      %p52 = scmp.eq.s32.totalorder %s10, 0
      %p53 = por %p51, %p52
      %p54 = scmp.ne.s32.totalorder %s43, %s46
      %p55 = scmp.eq.s32.totalorder %s15, 3
      %p56 = por %p54, %p55
      %p57 = scmp.ne.s32.totalorder %s46, %s47
      %p58 = scmp.eq.s32.totalorder %s15, 0
      %p59 = por %p57, %p58
      %p60 = scmp.ne.s32.totalorder %s46, %s47
      %p61 = scmp.eq.s32.totalorder %s16, 3
      %p62 = por %p60, %p61
      %p64 = scmp.ne.s32.totalorder %s47, %s63
      %p65 = scmp.eq.s32.totalorder %s16, 0
      %p66 = por %p64, %p65
      %s67 = ssub.s32 %s17, %s36
      %s68 = ssub.s32 %s18, %s32
      %s69 = sor.u32 %s67, %s68
      %s70 = ssub.s32 %s19, %s28
      %s71 = sor.u32 %s69, %s70
      %p72 = scmp.eq.s32.totalorder %s71, 0
      %s74 = sadd.s32 %s73, 1
      %s75 = scalar_select %p72, %s73, %s74
      %p78 = pneg %p72
      %p79 = scmp.eq.s32.totalorder %s10, 3
      %p80 = por %p78, %p79
      %p81 = scmp.ne.s32.totalorder %s73, %s76
      %p82 = scmp.eq.s32.totalorder %s10, 0
      %p83 = por %p81, %p82
      %p84 = scmp.ne.s32.totalorder %s73, %s76
      %p85 = scmp.eq.s32.totalorder %s15, 3
      %p86 = por %p84, %p85
      %p87 = scmp.ne.s32.totalorder %s76, %s77
      %p88 = scmp.eq.s32.totalorder %s15, 0
      %p89 = por %p87, %p88
      %p90 = scmp.ne.s32.totalorder %s76, %s77
      %p91 = scmp.eq.s32.totalorder %s16, 3
      %p92 = por %p90, %p91
      %p94 = scmp.ne.s32.totalorder %s77, %s93
      %p95 = scmp.eq.s32.totalorder %s16, 0
      %p96 = por %p94, %p95
      %s97 = ssub.s32 %s17, %s36
      %s98 = ssub.s32 %s18, %s32
      %s99 = sor.u32 %s97, %s98
      %s100 = ssub.s32 %s19, %s28
      %s101 = sor.u32 %s99, %s100
      %p102 = scmp.eq.s32.totalorder %s101, 0
      %s104 = sadd.s32 %s103, 1
      %s105 = scalar_select %p102, %s103, %s104
      %p108 = pneg %p102
      %p109 = scmp.eq.s32.totalorder %s10, 3
      %p110 = por %p108, %p109
      %p111 = scmp.ne.s32.totalorder %s103, %s106
      %p112 = scmp.eq.s32.totalorder %s10, 0
      %p113 = por %p111, %p112
      %p114 = scmp.ne.s32.totalorder %s103, %s106
      %p115 = scmp.eq.s32.totalorder %s15, 3
      %p116 = por %p114, %p115
      %p117 = scmp.ne.s32.totalorder %s106, %s107
      %p118 = scmp.eq.s32.totalorder %s15, 0
      %p119 = por %p117, %p118
      %p120 = scmp.ne.s32.totalorder %s106, %s107
      %p121 = scmp.eq.s32.totalorder %s16, 3
      %p122 = por %p120, %p121
      %p124 = scmp.ne.s32.totalorder %s107, %s123
      %p125 = scmp.eq.s32.totalorder %s16, 0
      %p126 = por %p124, %p125
      %s127 = ssub.s32 %s17, %s36
      %s128 = ssub.s32 %s18, %s32
      %s129 = sor.u32 %s127, %s128
      %p130 = scmp.eq.s32.totalorder %s129, 0
      %s132 = sadd.s32 %s131, 1
      %s133 = scalar_select %p130, %s131, %s132
      %p136 = pneg %p130
      %p137 = scmp.eq.s32.totalorder %s10, 3
      %p138 = por %p136, %p137
      %p139 = scmp.ne.s32.totalorder %s131, %s134
      %p140 = scmp.eq.s32.totalorder %s10, 0
      %p141 = por %p139, %p140
      %p142 = scmp.ne.s32.totalorder %s131, %s134
      %p143 = scmp.eq.s32.totalorder %s15, 3
      %p144 = por %p142, %p143
      %p145 = scmp.ne.s32.totalorder %s134, %s135
      %p146 = scmp.eq.s32.totalorder %s15, 0
      %p147 = por %p145, %p146
      %p148 = scmp.ne.s32.totalorder %s134, %s135
      %p149 = scmp.eq.s32.totalorder %s16, 3
      %p150 = por %p148, %p149
      %p152 = scmp.ne.s32.totalorder %s135, %s151
      %p153 = scmp.eq.s32.totalorder %s16, 0
      %p154 = por %p152, %p153
      %p155 = scmp.le.s32.totalorder 1, %s10
      %p156 = scmp.lt.s32.totalorder %s10, 5
      %p157 = pnand %p155, %p156
      %p158 = pneg %p157
      // Predicated region
      $region9: #{db_loss.5} parent=5 // pred_check
        _
      $region10: #{db_loss.5} parent=5 // pred_check_branch
        %160 = sbr.rel (%p157) target = $region12
      $region11: #{db_loss.5} parent=5 // pred_region
        %s161 = ssub.s32 %s10, 1
      $region12: #{db_loss.5} parent=5 // pred_fallthru
        _
      %p162 = scmp.lt.s32.totalorder %s10, 4
      // Predicated region
      $region13: #{db_loss.5} parent=5 // pred_check
        %p163 = pneg %p162
      $region14: #{db_loss.5} parent=5 // pred_check_branch
        %165 = sbr.rel (%p163) target = $region16
      $region15: #{db_loss.5} parent=5 // pred_region
        // Predicated region
        $region17: #{db_loss.5} parent=15 // pred_check
          %p166 = pneg %p53
        $region18: #{db_loss.5} parent=15 // pred_check_branch
          %168 = sbr.rel (%p166) target = $region20
        $region19: #{db_loss.5} parent=15 // pred_region
          %s169 = sand.u32 %s43, 1
          %s170 = sand.u32 %s43, 1
          %s171 = smul.addr %s170, 3
          %s172 = scalar_lea.vmem [#allocation2], %s171
          %s173 = sadd.s32 %s19, %s18
          %s174 = smul.addr %s17, 6
          %s175 = sadd.s32 %s173, %s174
          %s176 = scalar_lea.vmem %s0, %s175
          // Predicated region
          $region21: #{db_loss.5} parent=19 // pred_check
            _
          $region22: #{db_loss.5} parent=19 // pred_check_branch
            %178 = sbr.rel (0) target = $region24
          $region23: #{db_loss.5} parent=19 // pred_region
            // Predicated region
            $region25: #{db_loss.5} parent=23 // pred_check
              _
            $region26: #{db_loss.5} parent=23 // pred_check_branch
              %180 = sbr.rel target = $region28
            $region27: #{db_loss.5} parent=23 // pred_region
              // Predicated region
              $region40: #{db_loss.5} parent=27 // pred_check
                _
              $region41: #{db_loss.5} parent=27 // pred_check_branch
                %199 = sbr.rel (0) target = $region43
              $region42: #{db_loss.5} parent=27 // pred_region
                loop: start=0, step=1, limit=1
                $region44: #{db_loss.5} parent=42 // loop_pre_header
                  _
                $region45: #{db_loss.5} parent=42 // loop_header
                  %s202 = sphi 0, %s206
                  %p203 = scmp.ge.s32.totalorder %s202, 1
                  %s207 = sphi %s176, %s176
                  %s208 = sphi %s172, %s172
                $region46: #{db_loss.5} parent=42 // loop_header_branch
                  %205 = sbr.rel (%p203) target = $region50
                $region47: #{db_loss.5} parent=42 // loop_body
                  %v209 = vld [vmem:[%s207] sm:$0x1]
                  %210 = vst [vmem:[%s208] sm:$0x1] %v209
                  %v211 = vld [vmem:[%s207 + $0x2] sm:$0x1]
                  %212 = vst [vmem:[%s208 + $0x1] sm:$0x1] %v211
                  %v213 = vld [vmem:[%s207 + $0x4] sm:$0x1]
                  %214 = vst [vmem:[%s208 + $0x2] sm:$0x1] %v213
                $region48: #{db_loss.5} parent=42 // loop_footer
                  %s206 = sadd.s32 1, %s202
                $region49: #{db_loss.5} parent=42 // loop_footer_branch
                  %201 = sbr.rel target = $region45
                $region50: #{db_loss.5} parent=42 // loop_exit
                  _
              $region43: #{db_loss.5} parent=27 // pred_fallthru
                _
            $region28: #{db_loss.5} parent=23 // pred_fallthru
              _
            // Predicated region
            $region29: #{db_loss.5} parent=23 // pred_check
              _
            $region30: #{db_loss.5} parent=23 // pred_check_branch
              %182 = sbr.rel (0) target = $region32
            $region31: #{db_loss.5} parent=23 // pred_region
              loop: start=0, step=1, limit=1
              $region33: #{db_loss.5} parent=31 // loop_pre_header
                _
              $region34: #{db_loss.5} parent=31 // loop_header
                %s185 = sphi 0, %s189
                %p186 = scmp.ge.s32.totalorder %s185, 1
                %s190 = sphi %s176, %s176
                %s191 = sphi %s172, %s172
              $region35: #{db_loss.5} parent=31 // loop_header_branch
                %188 = sbr.rel (%p186) target = $region39
              $region36: #{db_loss.5} parent=31 // loop_body
                %v192 = vld [vmem:[%s190] sm:$0x1]
                %193 = vst [vmem:[%s191] sm:$0x1] %v192
                %v194 = vld [vmem:[%s190 + $0x2] sm:$0x1]
                %195 = vst [vmem:[%s191 + $0x1] sm:$0x1] %v194
                %v196 = vld [vmem:[%s190 + $0x4] sm:$0x1]
                %197 = vst [vmem:[%s191 + $0x2] sm:$0x1] %v196
              $region37: #{db_loss.5} parent=31 // loop_footer
                %s189 = sadd.s32 1, %s185
              $region38: #{db_loss.5} parent=31 // loop_footer_branch
                %184 = sbr.rel target = $region34
              $region39: #{db_loss.5} parent=31 // loop_exit
                _
            $region32: #{db_loss.5} parent=23 // pred_fallthru
              _
          $region24: #{db_loss.5} parent=19 // pred_fallthru
            _
          %215 = vnop
        $region20: #{db_loss.5} parent=15 // pred_fallthru
          _
        // Predicated region
        $region51: #{db_loss.5} parent=15 // pred_check
          %p216 = pneg %p83
        $region52: #{db_loss.5} parent=15 // pred_check_branch
          %218 = sbr.rel (%p216) target = $region54
        $region53: #{db_loss.5} parent=15 // pred_region
          %s219 = sand.u32 %s73, 1
          %s220 = sand.u32 %s73, 1
          %s221 = smul.addr %s220, 4
          %s222 = scalar_lea.vmem [#allocation3], %s221
          %s223 = sadd.s32 %s19, %s18
          %s224 = smul.addr %s17, 2
          %s225 = sadd.s32 %s223, %s224
          %s226 = scalar_lea.vmem %s1, %s225
          // Predicated region
          $region55: #{db_loss.5} parent=53 // pred_check
            _
          $region56: #{db_loss.5} parent=53 // pred_check_branch
            %228 = sbr.rel (0) target = $region58
          $region57: #{db_loss.5} parent=53 // pred_region
            // Predicated region
            $region59: #{db_loss.5} parent=57 // pred_check
              _
            $region60: #{db_loss.5} parent=57 // pred_check_branch
              %230 = sbr.rel target = $region62
            $region61: #{db_loss.5} parent=57 // pred_region
              // Predicated region
              $region74: #{db_loss.5} parent=61 // pred_check
                _
              $region75: #{db_loss.5} parent=61 // pred_check_branch
                %251 = sbr.rel (0) target = $region77
              $region76: #{db_loss.5} parent=61 // pred_region
                loop: start=0, step=1, limit=1
                $region78: #{db_loss.5} parent=76 // loop_pre_header
                  _
                $region79: #{db_loss.5} parent=76 // loop_header
                  %s254 = sphi 0, %s258
                  %p255 = scmp.ge.s32.totalorder %s254, 1
                  %s259 = sphi %s226, %s226
                  %s260 = sphi %s222, %s222
                $region80: #{db_loss.5} parent=76 // loop_header_branch
                  %257 = sbr.rel (%p255) target = $region84
                $region81: #{db_loss.5} parent=76 // loop_body
                  %v261 = vld [vmem:[%s259] sm:$0x1]
                  %262 = vst [vmem:[%s260] sm:$0x1] %v261
                  %v263 = vld [vmem:[%s259 + $0x4] sm:$0x1]
                  %264 = vst [vmem:[%s260 + $0x1] sm:$0x1] %v263
                  %v265 = vld [vmem:[%s259 + $0x8] sm:$0x1]
                  %266 = vst [vmem:[%s260 + $0x2] sm:$0x1] %v265
                  %v267 = vld [vmem:[%s259 + $0xc] sm:$0x1]
                  %268 = vst [vmem:[%s260 + $0x3] sm:$0x1] %v267
                $region82: #{db_loss.5} parent=76 // loop_footer
                  %s258 = sadd.s32 1, %s254
                $region83: #{db_loss.5} parent=76 // loop_footer_branch
                  %253 = sbr.rel target = $region79
                $region84: #{db_loss.5} parent=76 // loop_exit
                  _
              $region77: #{db_loss.5} parent=61 // pred_fallthru
                _
            $region62: #{db_loss.5} parent=57 // pred_fallthru
              _
            // Predicated region
            $region63: #{db_loss.5} parent=57 // pred_check
              _
            $region64: #{db_loss.5} parent=57 // pred_check_branch
              %232 = sbr.rel (0) target = $region66
            $region65: #{db_loss.5} parent=57 // pred_region
              loop: start=0, step=1, limit=1
              $region67: #{db_loss.5} parent=65 // loop_pre_header
                _
              $region68: #{db_loss.5} parent=65 // loop_header
                %s235 = sphi 0, %s239
                %p236 = scmp.ge.s32.totalorder %s235, 1
                %s240 = sphi %s226, %s226
                %s241 = sphi %s222, %s222
              $region69: #{db_loss.5} parent=65 // loop_header_branch
                %238 = sbr.rel (%p236) target = $region73
              $region70: #{db_loss.5} parent=65 // loop_body
                %v242 = vld [vmem:[%s240] sm:$0x1]
                %243 = vst [vmem:[%s241] sm:$0x1] %v242
                %v244 = vld [vmem:[%s240 + $0x4] sm:$0x1]
                %245 = vst [vmem:[%s241 + $0x1] sm:$0x1] %v244
                %v246 = vld [vmem:[%s240 + $0x8] sm:$0x1]
                %247 = vst [vmem:[%s241 + $0x2] sm:$0x1] %v246
                %v248 = vld [vmem:[%s240 + $0xc] sm:$0x1]
                %249 = vst [vmem:[%s241 + $0x3] sm:$0x1] %v248
              $region71: #{db_loss.5} parent=65 // loop_footer
                %s239 = sadd.s32 1, %s235
              $region72: #{db_loss.5} parent=65 // loop_footer_branch
                %234 = sbr.rel target = $region68
              $region73: #{db_loss.5} parent=65 // loop_exit
                _
            $region66: #{db_loss.5} parent=57 // pred_fallthru
              _
          $region58: #{db_loss.5} parent=53 // pred_fallthru
            _
          %269 = vnop
        $region54: #{db_loss.5} parent=15 // pred_fallthru
          _
      $region16: #{db_loss.5} parent=5 // pred_fallthru
        _
      %p270 = scmp.le.s32.totalorder 1, %s10
      %p271 = scmp.lt.s32.totalorder %s10, 5
      %p272 = pnand %p270, %p271
      %p273 = pneg %p272
      // Predicated region
      $region85: #{db_loss.5} parent=5 // pred_check
        _
      $region86: #{db_loss.5} parent=5 // pred_check_branch
        %275 = sbr.rel (%p272) target = $region88
      $region87: #{db_loss.5} parent=5 // pred_region
        %s276 = ssub.s32 %s10, 1
        %s277 = sand.u32 %s46, 1
        %s278 = sand.u32 %s46, 1
        %s279 = smul.addr %s278, 3
        %s280 = scalar_lea.vmem [#allocation2], %s279
        // Predicated region
        $region89: #{db_loss.5} parent=87 // pred_check
          %p281 = pneg %p59
        $region90: #{db_loss.5} parent=87 // pred_check_branch
          %283 = sbr.rel (%p281) target = $region92
        $region91: #{db_loss.5} parent=87 // pred_region
          _
        $region92: #{db_loss.5} parent=87 // pred_fallthru
          _
        %s284 = sand.u32 %s76, 1
        %s285 = sand.u32 %s76, 1
        %s286 = smul.addr %s285, 4
        %s287 = scalar_lea.vmem [#allocation3], %s286
        // Predicated region
        $region93: #{db_loss.5} parent=87 // pred_check
          %p288 = pneg %p89
        $region94: #{db_loss.5} parent=87 // pred_check_branch
          %290 = sbr.rel (%p288) target = $region96
        $region95: #{db_loss.5} parent=87 // pred_region
          _
        $region96: #{db_loss.5} parent=87 // pred_fallthru
          _
        %s291 = sand.u32 %s46, 1
        %s292 = sand.u32 %s46, 1
        %s293 = smul.addr %s292, 3
        %s294 = scalar_lea.vmem [#allocation2], %s293
        %p295 = pneg %p59
        %p296 = pneg %p56
        %s297 = sand.u32 %s76, 1
        %s298 = sand.u32 %s76, 1
        %s299 = smul.addr %s298, 4
        %s300 = scalar_lea.vmem [#allocation3], %s299
        %p301 = pneg %p89
        %p302 = pneg %p86
        %p303 = pneg %p119
        %p304 = pneg %p116
        %p305 = scmp.lt.s32.totalorder %s20, 1
        %s306 = scalar_select %p305, %s20, 1
        %p307 = scmp.lt.s32.totalorder %s21, 1
        %s308 = scalar_select %p307, %s21, 1
        %p309 = scmp.lt.s32.totalorder %s22, 0
        %s310 = scalar_select %p309, %s22, 0
        %s311 = sadd.s32 %s310, %s308
        %s312 = smul.addr %s306, 2
        %s313 = sadd.s32 %s311, %s312
        %s314 = scalar_lea.vmem %s2, %s313
        %p315 = pneg %p147
        %p316 = pneg %p144
        %p317 = scmp.lt.s32.totalorder %s20, 1
        %s318 = scalar_select %p317, %s20, 1
        %p319 = scmp.lt.s32.totalorder %s21, 1
        %s320 = scalar_select %p319, %s21, 1
        %s321 = smul.addr %s318, 2
        %s322 = sadd.s32 %s320, %s321
        %s323 = smul.addr %s322, 8
        %s324 = scalar_lea.vmem %s3, %s323
        %p325 = scmp.lt.s32.totalorder %s20, 1
        %s326 = scalar_select %p325, %s20, 1
        %p327 = scmp.lt.s32.totalorder %s21, 1
        %s328 = scalar_select %p327, %s21, 1
        %p329 = scmp.lt.s32.totalorder %s22, 0
        %s330 = scalar_select %p329, %s22, 0
        %s331 = sadd.s32 %s330, %s328
        %s332 = smul.addr %s326, 2
        %s333 = sadd.s32 %s331, %s332
        %s334 = scalar_lea.vmem %s2, %s333
        %p335 = scmp.lt.s32.totalorder %s20, 1
        %s336 = scalar_select %p335, %s20, 1
        %p337 = scmp.lt.s32.totalorder %s21, 1
        %s338 = scalar_select %p337, %s21, 1
        %s339 = smul.addr %s336, 2
        %s340 = sadd.s32 %s338, %s339
        %s341 = smul.addr %s340, 8
        %s342 = scalar_lea.vmem %s3, %s341
        %v343 = vld [vmem:[%s280] sm:$0x1]
        %s344 = scalar_lea.vmem %s280, 1 [#allocation2]
        %v345 = vld [vmem:[%s344] sm:$0x1]
        %s346 = scalar_lea.vmem %s280, 2 [#allocation2]
        %v347 = vld [vmem:[%s346] sm:$0x1]
        %v348 = vld [vmem:[%s287] sm:$0x1]
        %s349 = scalar_lea.vmem %s287, 1 [#allocation3]
        %v350 = vld [vmem:[%s349] sm:$0x1]
        %s351 = scalar_lea.vmem %s287, 2 [#allocation3]
        %v352 = vld [vmem:[%s351] sm:$0x1]
        %s353 = scalar_lea.vmem %s287, 3 [#allocation3]
        %v354 = vld [vmem:[%s353] sm:$0x1]
        %v355 = vmul.f32 %v348, %v350
        %v356 = vsub.f32 %v350, %v355
        %vm357 = vcmp.gt.f32.partialorder %v348, 0.5
        %v358 = vsub.f32 1.0, %v343
        %v359 = vsel %vm357, %v343, %v358
        %v360 = vlog2.pop %v359
        %v361 = vmul.f32 %v360, 0.6931472
        %v362 = vsub.f32 0.0, %v361
        %v363 = vmin.f32 %v362, 100.0
        %v364 = vmul.f32 %v363, %v356
        %365 = vst [vmem:[%s334] sm:$0x1] %v364
        %v366 = vsub.f32 %v345, %v352
        %v367 = vand.u32 2147483647, %v366
        %v368 = vmul.f32 %v367, %v354
        %v369 = vmul.f32 %v347, %v350
        %v370 = vadd.f32 %v355, 0.0
        %v371 = vadd.f32 %v350, 0.0
        %v372 = vmul.f32 %v363, %v355
        %v373 = vadd.f32 %v372, 0.0
        %v374 = vadd.f32 %v368, 0.0
        %v375 = vadd.f32 %v354, 0.0
        %v376 = vmul.f32 %v369, %v355
        %v377 = vadd.f32 %v376, 0.0
        %v378 = vmul.f32 %v369, %v369
        %v379 = vadd.f32 %v378, 0.0
        %v380 = vadd.f32 %v364, 0.0
        %v382 = vlaneseq
        %v383 = vshrl.u32 %v382, 7
        %v384 = vsub.s32 0, %v383
        %v385 = vrot.slane %v371, %v384
        %v388 = vlaneseq
        %v389 = vshrl.u32 %v388, 7
        %v390 = vsub.s32 0, %v389
        %v391 = vrot.slane %v373, %v390
        %v394 = vlaneseq
        %v395 = vshrl.u32 %v394, 7
        %v396 = vsub.s32 0, %v395
        %v397 = vrot.slane %v374, %v396
        %v400 = vlaneseq
        %v401 = vshrl.u32 %v400, 7
        %v402 = vsub.s32 0, %v401
        %v403 = vrot.slane %v375, %v402
        %v406 = vlaneseq
        %v407 = vshrl.u32 %v406, 7
        %v408 = vsub.s32 0, %v407
        %v409 = vrot.slane %v377, %v408
        %v412 = vlaneseq
        %v413 = vshrl.u32 %v412, 7
        %v414 = vsub.s32 0, %v413
        %v415 = vrot.slane %v379, %v414
        %v418 = vlaneseq
        %v419 = vshrl.u32 %v418, 7
        %v420 = vsub.s32 0, %v419
        %v421 = vrot.slane %v380, %v420
        %vm423 = vcmask 1040384
        %v424 = vsel %vm423, %v370, %v385
        %vm425 = vcmask 1041408
        %v426 = vsel %vm425, %v424, %v391
        %vm427 = vcmask 1042432
        %v428 = vsel %vm427, %v426, %v397
        %vm429 = vcmask 1043456
        %v430 = vsel %vm429, %v428, %v403
        %vm431 = vcmask 1044480
        %v432 = vsel %vm431, %v430, %v409
        %vm433 = vcmask 1045504
        %v434 = vsel %vm433, %v432, %v415
        %vm435 = vcmask 1046528
        %v436 = vsel %vm435, %v434, %v421
        %p437 = scmp.eq.s32.totalorder %s22, 0
        // Predicated region
        $region97: #{db_loss.5} parent=87 // pred_check
          %p438 = pneg %p437
        $region98: #{db_loss.5} parent=87 // pred_check_branch
          %440 = sbr.rel (%p438) target = $region100
        $region99: #{db_loss.5} parent=87 // pred_region
          %441 = vst [vmem:[%s342] sm:$0xff] 0.0
        $region100: #{db_loss.5} parent=87 // pred_fallthru
          _
        %v442 = vld [vmem:[%s342] sm:$0xff]
        %v443 = vadd.f32 %v442, %v436
        %444 = vst [vmem:[%s342] sm:$0xff] %v443
        %p445 = scmp.lt.s32.totalorder %s20, 1
        %s446 = scalar_select %p445, %s20, 1
        %p447 = scmp.lt.s32.totalorder %s21, 1
        %s448 = scalar_select %p447, %s21, 1
        %p449 = scmp.lt.s32.totalorder %s22, 0
        %s450 = scalar_select %p449, %s22, 0
        %s451 = sadd.s32 %s450, %s448
        %s452 = smul.addr %s446, 2
        %s453 = sadd.s32 %s451, %s452
        %s454 = scalar_lea.vmem %s2, %s453
        %p455 = scmp.lt.s32.totalorder %s20, 1
        %s456 = scalar_select %p455, %s20, 1
        %p457 = scmp.lt.s32.totalorder %s21, 1
        %s458 = scalar_select %p457, %s21, 1
        %s459 = smul.addr %s456, 2
        %s460 = sadd.s32 %s458, %s459
        %s461 = smul.addr %s460, 8
        %s462 = scalar_lea.vmem %s3, %s461
        // Predicated region
        $region101: #{db_loss.5} parent=87 // pred_check
          %p463 = pneg %p116
        $region102: #{db_loss.5} parent=87 // pred_check_branch
          %465 = sbr.rel (%p463) target = $region104
        $region103: #{db_loss.5} parent=87 // pred_region
          _
        $region104: #{db_loss.5} parent=87 // pred_fallthru
          _
        // Predicated region
        $region105: #{db_loss.5} parent=87 // pred_check
          %p466 = pneg %p144
        $region106: #{db_loss.5} parent=87 // pred_check_branch
          %468 = sbr.rel (%p466) target = $region108
        $region107: #{db_loss.5} parent=87 // pred_region
          _
        $region108: #{db_loss.5} parent=87 // pred_fallthru
          _
      $region88: #{db_loss.5} parent=5 // pred_fallthru
        _
      %p469 = scmp.le.s32.totalorder 2, %s10
      // Predicated region
      $region109: #{db_loss.5} parent=5 // pred_check
        %p470 = pneg %p469
      $region110: #{db_loss.5} parent=5 // pred_check_branch
        %472 = sbr.rel (%p470) target = $region112
      $region111: #{db_loss.5} parent=5 // pred_region
        %s473 = ssub.s32 %s10, 2
        // Predicated region
        $region113: #{db_loss.5} parent=111 // pred_check
          %p474 = pneg %p122
        $region114: #{db_loss.5} parent=111 // pred_check_branch
          %476 = sbr.rel (%p474) target = $region116
        $region115: #{db_loss.5} parent=111 // pred_region
          %p477 = scmp.lt.s32.totalorder %s23, 1
          %s478 = scalar_select %p477, %s23, 1
          %p479 = scmp.lt.s32.totalorder %s24, 1
          %s480 = scalar_select %p479, %s24, 1
          %p481 = scmp.lt.s32.totalorder %s25, 0
          %s482 = scalar_select %p481, %s25, 0
          %s483 = sadd.s32 %s482, %s480
          %s484 = smul.addr %s478, 2
          %s485 = sadd.s32 %s483, %s484
          %s486 = scalar_lea.vmem %s2, %s485
        $region116: #{db_loss.5} parent=111 // pred_fallthru
          _
        // Predicated region
        $region117: #{db_loss.5} parent=111 // pred_check
          %p487 = pneg %p150
        $region118: #{db_loss.5} parent=111 // pred_check_branch
          %489 = sbr.rel (%p487) target = $region120
        $region119: #{db_loss.5} parent=111 // pred_region
          %p490 = scmp.lt.s32.totalorder %s23, 1
          %s491 = scalar_select %p490, %s23, 1
          %p492 = scmp.lt.s32.totalorder %s24, 1
          %s493 = scalar_select %p492, %s24, 1
          %s494 = smul.addr %s491, 2
          %s495 = sadd.s32 %s493, %s494
          %s496 = smul.addr %s495, 8
          %s497 = scalar_lea.vmem %s3, %s496
        $region120: #{db_loss.5} parent=111 // pred_fallthru
          _
      $region112: #{db_loss.5} parent=5 // pred_fallthru
        _
    $region6: #{db_loss.5} parent=1 // loop_footer
      %s14 = sadd.s32 1, %s10
    $region7: #{db_loss.5} parent=1 // loop_footer_branch
      %9 = sbr.rel target = $region3
    $region8: #{db_loss.5} parent=1 // loop_exit
      _

// kernel: db_loss.6
$region0: #{db_loss.6}
  #allocation0 [shape = 'u32[]', space=smem, size = 0x4, offset = 0x4, fixed_abs, tag = 'smem constant byte address 0x4 - core index']
  #allocation1 [shape = 'u32[144,128]{1,0:T(1,128)}', space=vmem, size = 0x12000, scoped, tag = 'internal scratch']
  %s0 = inlined_call_operand.vmem [shape: f32[16], index: 0, kind: input, shape index: {}]
  %s1 = inlined_call_operand.vmem [shape: f32[4,128], index: 1, kind: input, shape index: {}]
  %s2 = inlined_call_operand.vmem [shape: f32[2,16,128], index: 2, kind: output, shape index: {}]
  %s3 = sld [smem:[#allocation0]]
  $region26: #{db_loss.6} parent=0
    _
  %s5 = ssub.s32 1, %s3
  %s6 = scalar_select 0, %s5, %s3
  $region1: #{db_loss.6} parent=0
    #allocation2 [shape = 'u8[512]{0}', space=smem, size = 0x200, scoped, tag = 'input window, operand 0, single buffered']
    #allocation3 [shape = 's32[1]{0}', space=sflag, size = 0x4, scoped, tag = 'scoped memory for db_loss.6']
    %7 = vsyncpa [#allocation3], 0
    // Predicated region
    $region2: #{db_loss.6} parent=1 // pred_check
      _
    $region3: #{db_loss.6} parent=1 // pred_check_branch
      %9 = sbr.rel (0) target = $region5
    $region4: #{db_loss.6} parent=1 // pred_region
      %s11 = ssub.s32 16, 16
      %12 = vsyncadd [#allocation3], %s11
      %s14 = sshll.u32 %s0, 4
      %s15 = int_to_ptr.vmem [resolvable:$true] %s14
      %17 = dma.vmem_to_smem %s15, 16, [#allocation2], [#allocation3]
    $region5: #{db_loss.6} parent=1 // pred_fallthru
      _
    // Predicated region
    $region6: #{db_loss.6} parent=1 // pred_check
      _
    $region7: #{db_loss.6} parent=1 // pred_check_branch
      %19 = sbr.rel (0) target = $region9
    $region8: #{db_loss.6} parent=1 // pred_region
      _
    $region9: #{db_loss.6} parent=1 // pred_fallthru
      _
    // Predicated region
    $region10: #{db_loss.6} parent=1 // pred_check
      _
    $region11: #{db_loss.6} parent=1 // pred_check_branch
      %21 = sbr.rel (0) target = $region13
    $region12: #{db_loss.6} parent=1 // pred_region
      %22 = dma.done [#allocation3], 16
    $region13: #{db_loss.6} parent=1 // pred_fallthru
      _
    %23 = sfence
    %v24 = vld [vmem:[%s1] sm:$0xf]
    %p25 = scmp.eq.s32.totalorder 0, 0
    // Predicated region
    $region14: #{db_loss.6} parent=1 // pred_check
      %p26 = pneg %p25
    $region15: #{db_loss.6} parent=1 // pred_check_branch
      %28 = sbr.rel (%p26) target = $region17
    $region16: #{db_loss.6} parent=1 // pred_region
      %29 = vst [vmem:[%s2] sm:$0xff] 0.0
      %30 = vst [vmem:[%s2 + $0x8] sm:$0xff] 0.0
      %31 = vst [vmem:[%s2 + $0x10] sm:$0xff] 0.0
      %32 = vst [vmem:[%s2 + $0x18] sm:$0xff] 0.0
    $region17: #{db_loss.6} parent=1 // pred_fallthru
      _
    %s33 = sld [smem:[#allocation2]]
    %v34 = vstv %s33
    %vm35 = vcmp.ge.f32.partialorder %v24, %v34
    %v36 = vsel %vm35, 1.0, 0.0
    %vm37 = vcmask 1043456
    %v38 = vsel %vm37, %v36, 0.0
    %v39 = vrot.slane %v38, 4
    %v40 = vadd.f32 %v38, %v39
    %v41 = vrot.slane %v40, 2
    %v42 = vadd.f32 %v40, %v41
    %v43 = vrot.slane %v42, 1
    %v44 = vadd.f32 %v42, %v43
    %s45 = sld [smem:[#allocation2 + $0x1]]
    %v46 = vstv %s45
    %vm47 = vcmp.ge.f32.partialorder %v24, %v46
    %v48 = vsel %vm47, 1.0, 0.0
    %v49 = vsel %vm37, %v48, 0.0
    %v50 = vrot.slane %v49, 4
    %v51 = vadd.f32 %v49, %v50
    %v52 = vrot.slane %v51, 2
    %v53 = vadd.f32 %v51, %v52
    %v54 = vrot.slane %v53, 1
    %v55 = vadd.f32 %v53, %v54
    %s56 = sld [smem:[#allocation2 + $0x2]]
    %v57 = vstv %s56
    %vm58 = vcmp.ge.f32.partialorder %v24, %v57
    %v59 = vsel %vm58, 1.0, 0.0
    %v60 = vsel %vm37, %v59, 0.0
    %v61 = vrot.slane %v60, 4
    %v62 = vadd.f32 %v60, %v61
    %v63 = vrot.slane %v62, 2
    %v64 = vadd.f32 %v62, %v63
    %v65 = vrot.slane %v64, 1
    %v66 = vadd.f32 %v64, %v65
    %s67 = sld [smem:[#allocation2 + $0x3]]
    %v68 = vstv %s67
    %vm69 = vcmp.ge.f32.partialorder %v24, %v68
    %v70 = vsel %vm69, 1.0, 0.0
    %v71 = vsel %vm37, %v70, 0.0
    %v72 = vrot.slane %v71, 4
    %v73 = vadd.f32 %v71, %v72
    %v74 = vrot.slane %v73, 2
    %v75 = vadd.f32 %v73, %v74
    %v76 = vrot.slane %v75, 1
    %v77 = vadd.f32 %v75, %v76
    %s78 = sld [smem:[#allocation2 + $0x4]]
    %v79 = vstv %s78
    %vm80 = vcmp.ge.f32.partialorder %v24, %v79
    %v81 = vsel %vm80, 1.0, 0.0
    %v82 = vsel %vm37, %v81, 0.0
    %v83 = vrot.slane %v82, 4
    %v84 = vadd.f32 %v82, %v83
    %v85 = vrot.slane %v84, 2
    %v86 = vadd.f32 %v84, %v85
    %v87 = vrot.slane %v86, 1
    %v88 = vadd.f32 %v86, %v87
    %s89 = sld [smem:[#allocation2 + $0x5]]
    %v90 = vstv %s89
    %vm91 = vcmp.ge.f32.partialorder %v24, %v90
    %v92 = vsel %vm91, 1.0, 0.0
    %v93 = vsel %vm37, %v92, 0.0
    %v94 = vrot.slane %v93, 4
    %v95 = vadd.f32 %v93, %v94
    %v96 = vrot.slane %v95, 2
    %v97 = vadd.f32 %v95, %v96
    %v98 = vrot.slane %v97, 1
    %v99 = vadd.f32 %v97, %v98
    %s100 = sld [smem:[#allocation2 + $0x6]]
    %v101 = vstv %s100
    %vm102 = vcmp.ge.f32.partialorder %v24, %v101
    %v103 = vsel %vm102, 1.0, 0.0
    %v104 = vsel %vm37, %v103, 0.0
    %v105 = vrot.slane %v104, 4
    %v106 = vadd.f32 %v104, %v105
    %v107 = vrot.slane %v106, 2
    %v108 = vadd.f32 %v106, %v107
    %v109 = vrot.slane %v108, 1
    %v110 = vadd.f32 %v108, %v109
    %s111 = sld [smem:[#allocation2 + $0x7]]
    %v112 = vstv %s111
    %vm113 = vcmp.ge.f32.partialorder %v24, %v112
    %v114 = vsel %vm113, 1.0, 0.0
    %v115 = vsel %vm37, %v114, 0.0
    %v116 = vrot.slane %v115, 4
    %v117 = vadd.f32 %v115, %v116
    %v118 = vrot.slane %v117, 2
    %v119 = vadd.f32 %v117, %v118
    %v120 = vrot.slane %v119, 1
    %v121 = vadd.f32 %v119, %v120
    %s122 = sld [smem:[#allocation2 + $0x8]]
    %v123 = vstv %s122
    %vm124 = vcmp.ge.f32.partialorder %v24, %v123
    %v125 = vsel %vm124, 1.0, 0.0
    %v126 = vsel %vm37, %v125, 0.0
    %v127 = vrot.slane %v126, 4
    %v128 = vadd.f32 %v126, %v127
    %v129 = vrot.slane %v128, 2
    %v130 = vadd.f32 %v128, %v129
    %v131 = vrot.slane %v130, 1
    %v132 = vadd.f32 %v130, %v131
    %s133 = sld [smem:[#allocation2 + $0x9]]
    %v134 = vstv %s133
    %vm135 = vcmp.ge.f32.partialorder %v24, %v134
    %v136 = vsel %vm135, 1.0, 0.0
    %v137 = vsel %vm37, %v136, 0.0
    %v138 = vrot.slane %v137, 4
    %v139 = vadd.f32 %v137, %v138
    %v140 = vrot.slane %v139, 2
    %v141 = vadd.f32 %v139, %v140
    %v142 = vrot.slane %v141, 1
    %v143 = vadd.f32 %v141, %v142
    %s144 = sld [smem:[#allocation2 + $0xa]]
    %v145 = vstv %s144
    %vm146 = vcmp.ge.f32.partialorder %v24, %v145
    %v147 = vsel %vm146, 1.0, 0.0
    %v148 = vsel %vm37, %v147, 0.0
    %v149 = vrot.slane %v148, 4
    %v150 = vadd.f32 %v148, %v149
    %v151 = vrot.slane %v150, 2
    %v152 = vadd.f32 %v150, %v151
    %v153 = vrot.slane %v152, 1
    %v154 = vadd.f32 %v152, %v153
    %s155 = sld [smem:[#allocation2 + $0xb]]
    %v156 = vstv %s155
    %vm157 = vcmp.ge.f32.partialorder %v24, %v156
    %v158 = vsel %vm157, 1.0, 0.0
    %v159 = vsel %vm37, %v158, 0.0
    %v160 = vrot.slane %v159, 4
    %v161 = vadd.f32 %v159, %v160
    %v162 = vrot.slane %v161, 2
    %v163 = vadd.f32 %v161, %v162
    %v164 = vrot.slane %v163, 1
    %v165 = vadd.f32 %v163, %v164
    %s166 = sld [smem:[#allocation2 + $0xc]]
    %v167 = vstv %s166
    %vm168 = vcmp.ge.f32.partialorder %v24, %v167
    %v169 = vsel %vm168, 1.0, 0.0
    %v170 = vsel %vm37, %v169, 0.0
    %v171 = vrot.slane %v170, 4
    %v172 = vadd.f32 %v170, %v171
    %v173 = vrot.slane %v172, 2
    %v174 = vadd.f32 %v172, %v173
    %v175 = vrot.slane %v174, 1
    %v176 = vadd.f32 %v174, %v175
    %s177 = sld [smem:[#allocation2 + $0xd]]
    %v178 = vstv %s177
    %vm179 = vcmp.ge.f32.partialorder %v24, %v178
    %v180 = vsel %vm179, 1.0, 0.0
    %v181 = vsel %vm37, %v180, 0.0
    %v182 = vrot.slane %v181, 4
    %v183 = vadd.f32 %v181, %v182
    %v184 = vrot.slane %v183, 2
    %v185 = vadd.f32 %v183, %v184
    %v186 = vrot.slane %v185, 1
    %v187 = vadd.f32 %v185, %v186
    %s188 = sld [smem:[#allocation2 + $0xe]]
    %v189 = vstv %s188
    %vm190 = vcmp.ge.f32.partialorder %v24, %v189
    %v191 = vsel %vm190, 1.0, 0.0
    %v192 = vsel %vm37, %v191, 0.0
    %v193 = vrot.slane %v192, 4
    %v194 = vadd.f32 %v192, %v193
    %v195 = vrot.slane %v194, 2
    %v196 = vadd.f32 %v194, %v195
    %v197 = vrot.slane %v196, 1
    %v198 = vadd.f32 %v196, %v197
    %s199 = sld [smem:[#allocation2 + $0xf]]
    %v200 = vstv %s199
    %vm201 = vcmp.ge.f32.partialorder %v24, %v200
    %v202 = vsel %vm201, 1.0, 0.0
    %v203 = vsel %vm37, %v202, 0.0
    %v204 = vrot.slane %v203, 4
    %v205 = vadd.f32 %v203, %v204
    %v206 = vrot.slane %v205, 2
    %v207 = vadd.f32 %v205, %v206
    %v208 = vrot.slane %v207, 1
    %v209 = vadd.f32 %v207, %v208
    %v210 = vld [vmem:[%s2] sm:$0xff]
    %v211 = vld [vmem:[%s2 + $0x8] sm:$0xff]
    %vm212 = vcmask 1040384
    %v213 = vsel %vm212, %v44, %v55
    %vm214 = vcmask 1041408
    %v215 = vsel %vm214, %v213, %v66
    %vm216 = vcmask 1042432
    %v217 = vsel %vm216, %v215, %v77
    %v218 = vsel %vm37, %v217, %v88
    %vm219 = vcmask 1044480
    %v220 = vsel %vm219, %v218, %v99
    %vm221 = vcmask 1045504
    %v222 = vsel %vm221, %v220, %v110
    %vm223 = vcmask 1046528
    %v224 = vsel %vm223, %v222, %v121
    %v225 = vsel %vm212, %v132, %v143
    %v226 = vsel %vm214, %v225, %v154
    %v227 = vsel %vm216, %v226, %v165
    %v228 = vsel %vm37, %v227, %v176
    %v229 = vsel %vm219, %v228, %v187
    %v230 = vsel %vm221, %v229, %v198
    %v231 = vsel %vm223, %v230, %v209
    %v232 = vadd.f32 %v210, %v224
    %v233 = vadd.f32 %v211, %v231
    %234 = vst [vmem:[%s2] sm:$0xff] %v232
    %235 = vst [vmem:[%s2 + $0x8] sm:$0xff] %v233
    // Predicated region
    $region18: #{db_loss.6} parent=1 // pred_check
      _
    $region19: #{db_loss.6} parent=1 // pred_check_branch
      %237 = sbr.rel (0) target = $region21
    $region20: #{db_loss.6} parent=1 // pred_region
      _
    $region21: #{db_loss.6} parent=1 // pred_fallthru
      _
    // Predicated region
    $region22: #{db_loss.6} parent=1 // pred_check
      _
    $region23: #{db_loss.6} parent=1 // pred_check_branch
      %239 = sbr.rel (0) target = $region25
    $region24: #{db_loss.6} parent=1 // pred_region
      _
    $region25: #{db_loss.6} parent=1 // pred_fallthru
      _
    %240 = vsyncpa [#allocation3], 1

// kernel: db_loss.9
$region0: #{db_loss.9}
  #allocation0 [shape = 'u32[]', space=smem, size = 0x4, offset = 0x4, fixed_abs, tag = 'smem constant byte address 0x4 - core index']
  #allocation1 [shape = 'u32[144,128]{1,0:T(1,128)}', space=vmem, size = 0x12000, scoped, tag = 'internal scratch']
  %s0 = inlined_call_operand.vmem [shape: f32[16], index: 0, kind: input, shape index: {}]
  %s1 = inlined_call_operand.vmem [shape: f32[4,128], index: 1, kind: input, shape index: {}]
  %s2 = inlined_call_operand.vmem [shape: f32[2,16,128], index: 2, kind: output, shape index: {}]
  %s3 = sld [smem:[#allocation0]]
  $region26: #{db_loss.9} parent=0
    _
  %s5 = ssub.s32 1, %s3
  %s6 = scalar_select 0, %s5, %s3
  $region1: #{db_loss.9} parent=0
    #allocation2 [shape = 'u8[512]{0}', space=smem, size = 0x200, scoped, tag = 'input window, operand 0, single buffered']
    #allocation3 [shape = 's32[1]{0}', space=sflag, size = 0x4, scoped, tag = 'scoped memory for db_loss.9']
    %7 = vsyncpa [#allocation3], 0
    // Predicated region
    $region2: #{db_loss.9} parent=1 // pred_check
      _
    $region3: #{db_loss.9} parent=1 // pred_check_branch
      %9 = sbr.rel (0) target = $region5
    $region4: #{db_loss.9} parent=1 // pred_region
      %s11 = ssub.s32 16, 16
      %12 = vsyncadd [#allocation3], %s11
      %s14 = sshll.u32 %s0, 4
      %s15 = int_to_ptr.vmem [resolvable:$true] %s14
      %17 = dma.vmem_to_smem %s15, 16, [#allocation2], [#allocation3]
    $region5: #{db_loss.9} parent=1 // pred_fallthru
      _
    // Predicated region
    $region6: #{db_loss.9} parent=1 // pred_check
      _
    $region7: #{db_loss.9} parent=1 // pred_check_branch
      %19 = sbr.rel (0) target = $region9
    $region8: #{db_loss.9} parent=1 // pred_region
      _
    $region9: #{db_loss.9} parent=1 // pred_fallthru
      _
    // Predicated region
    $region10: #{db_loss.9} parent=1 // pred_check
      _
    $region11: #{db_loss.9} parent=1 // pred_check_branch
      %21 = sbr.rel (0) target = $region13
    $region12: #{db_loss.9} parent=1 // pred_region
      %22 = dma.done [#allocation3], 16
    $region13: #{db_loss.9} parent=1 // pred_fallthru
      _
    %23 = sfence
    %v24 = vld [vmem:[%s1] sm:$0xf]
    %p25 = scmp.eq.s32.totalorder 0, 0
    // Predicated region
    $region14: #{db_loss.9} parent=1 // pred_check
      %p26 = pneg %p25
    $region15: #{db_loss.9} parent=1 // pred_check_branch
      %28 = sbr.rel (%p26) target = $region17
    $region16: #{db_loss.9} parent=1 // pred_region
      %29 = vst [vmem:[%s2] sm:$0xff] 0.0
      %30 = vst [vmem:[%s2 + $0x8] sm:$0xff] 0.0
      %31 = vst [vmem:[%s2 + $0x10] sm:$0xff] 0.0
      %32 = vst [vmem:[%s2 + $0x18] sm:$0xff] 0.0
    $region17: #{db_loss.9} parent=1 // pred_fallthru
      _
    %s33 = sld [smem:[#allocation2]]
    %v34 = vstv %s33
    %vm35 = vcmp.ge.f32.partialorder %v24, %v34
    %v36 = vsel %vm35, 1.0, 0.0
    %vm37 = vcmask 1043456
    %v38 = vsel %vm37, %v36, 0.0
    %v39 = vrot.slane %v38, 4
    %v40 = vadd.f32 %v38, %v39
    %v41 = vrot.slane %v40, 2
    %v42 = vadd.f32 %v40, %v41
    %v43 = vrot.slane %v42, 1
    %v44 = vadd.f32 %v42, %v43
    %v45 = vsel %vm35, %v24, 0.0
    %v46 = vsel %vm37, %v45, 0.0
    %v47 = vrot.slane %v46, 4
    %v48 = vadd.f32 %v46, %v47
    %v49 = vrot.slane %v48, 2
    %v50 = vadd.f32 %v48, %v49
    %v51 = vrot.slane %v50, 1
    %v52 = vadd.f32 %v50, %v51
    %s53 = sld [smem:[#allocation2 + $0x1]]
    %v54 = vstv %s53
    %vm55 = vcmp.ge.f32.partialorder %v24, %v54
    %v56 = vsel %vm55, 1.0, 0.0
    %v57 = vsel %vm37, %v56, 0.0
    %v58 = vrot.slane %v57, 4
    %v59 = vadd.f32 %v57, %v58
    %v60 = vrot.slane %v59, 2
    %v61 = vadd.f32 %v59, %v60
    %v62 = vrot.slane %v61, 1
    %v63 = vadd.f32 %v61, %v62
    %v64 = vsel %vm55, %v24, 0.0
    %v65 = vsel %vm37, %v64, 0.0
    %v66 = vrot.slane %v65, 4
    %v67 = vadd.f32 %v65, %v66
    %v68 = vrot.slane %v67, 2
    %v69 = vadd.f32 %v67, %v68
    %v70 = vrot.slane %v69, 1
    %v71 = vadd.f32 %v69, %v70
    %s72 = sld [smem:[#allocation2 + $0x2]]
    %v73 = vstv %s72
    %vm74 = vcmp.ge.f32.partialorder %v24, %v73
    %v75 = vsel %vm74, 1.0, 0.0
    %v76 = vsel %vm37, %v75, 0.0
    %v77 = vrot.slane %v76, 4
    %v78 = vadd.f32 %v76, %v77
    %v79 = vrot.slane %v78, 2
    %v80 = vadd.f32 %v78, %v79
    %v81 = vrot.slane %v80, 1
    %v82 = vadd.f32 %v80, %v81
    %v83 = vsel %vm74, %v24, 0.0
    %v84 = vsel %vm37, %v83, 0.0
    %v85 = vrot.slane %v84, 4
    %v86 = vadd.f32 %v84, %v85
    %v87 = vrot.slane %v86, 2
    %v88 = vadd.f32 %v86, %v87
    %v89 = vrot.slane %v88, 1
    %v90 = vadd.f32 %v88, %v89
    %s91 = sld [smem:[#allocation2 + $0x3]]
    %v92 = vstv %s91
    %vm93 = vcmp.ge.f32.partialorder %v24, %v92
    %v94 = vsel %vm93, 1.0, 0.0
    %v95 = vsel %vm37, %v94, 0.0
    %v96 = vrot.slane %v95, 4
    %v97 = vadd.f32 %v95, %v96
    %v98 = vrot.slane %v97, 2
    %v99 = vadd.f32 %v97, %v98
    %v100 = vrot.slane %v99, 1
    %v101 = vadd.f32 %v99, %v100
    %v102 = vsel %vm93, %v24, 0.0
    %v103 = vsel %vm37, %v102, 0.0
    %v104 = vrot.slane %v103, 4
    %v105 = vadd.f32 %v103, %v104
    %v106 = vrot.slane %v105, 2
    %v107 = vadd.f32 %v105, %v106
    %v108 = vrot.slane %v107, 1
    %v109 = vadd.f32 %v107, %v108
    %s110 = sld [smem:[#allocation2 + $0x4]]
    %v111 = vstv %s110
    %vm112 = vcmp.ge.f32.partialorder %v24, %v111
    %v113 = vsel %vm112, 1.0, 0.0
    %v114 = vsel %vm37, %v113, 0.0
    %v115 = vrot.slane %v114, 4
    %v116 = vadd.f32 %v114, %v115
    %v117 = vrot.slane %v116, 2
    %v118 = vadd.f32 %v116, %v117
    %v119 = vrot.slane %v118, 1
    %v120 = vadd.f32 %v118, %v119
    %v121 = vsel %vm112, %v24, 0.0
    %v122 = vsel %vm37, %v121, 0.0
    %v123 = vrot.slane %v122, 4
    %v124 = vadd.f32 %v122, %v123
    %v125 = vrot.slane %v124, 2
    %v126 = vadd.f32 %v124, %v125
    %v127 = vrot.slane %v126, 1
    %v128 = vadd.f32 %v126, %v127
    %s129 = sld [smem:[#allocation2 + $0x5]]
    %v130 = vstv %s129
    %vm131 = vcmp.ge.f32.partialorder %v24, %v130
    %v132 = vsel %vm131, 1.0, 0.0
    %v133 = vsel %vm37, %v132, 0.0
    %v134 = vrot.slane %v133, 4
    %v135 = vadd.f32 %v133, %v134
    %v136 = vrot.slane %v135, 2
    %v137 = vadd.f32 %v135, %v136
    %v138 = vrot.slane %v137, 1
    %v139 = vadd.f32 %v137, %v138
    %v140 = vsel %vm131, %v24, 0.0
    %v141 = vsel %vm37, %v140, 0.0
    %v142 = vrot.slane %v141, 4
    %v143 = vadd.f32 %v141, %v142
    %v144 = vrot.slane %v143, 2
    %v145 = vadd.f32 %v143, %v144
    %v146 = vrot.slane %v145, 1
    %v147 = vadd.f32 %v145, %v146
    %s148 = sld [smem:[#allocation2 + $0x6]]
    %v149 = vstv %s148
    %vm150 = vcmp.ge.f32.partialorder %v24, %v149
    %v151 = vsel %vm150, 1.0, 0.0
    %v152 = vsel %vm37, %v151, 0.0
    %v153 = vrot.slane %v152, 4
    %v154 = vadd.f32 %v152, %v153
    %v155 = vrot.slane %v154, 2
    %v156 = vadd.f32 %v154, %v155
    %v157 = vrot.slane %v156, 1
    %v158 = vadd.f32 %v156, %v157
    %v159 = vsel %vm150, %v24, 0.0
    %v160 = vsel %vm37, %v159, 0.0
    %v161 = vrot.slane %v160, 4
    %v162 = vadd.f32 %v160, %v161
    %v163 = vrot.slane %v162, 2
    %v164 = vadd.f32 %v162, %v163
    %v165 = vrot.slane %v164, 1
    %v166 = vadd.f32 %v164, %v165
    %s167 = sld [smem:[#allocation2 + $0x7]]
    %v168 = vstv %s167
    %vm169 = vcmp.ge.f32.partialorder %v24, %v168
    %v170 = vsel %vm169, 1.0, 0.0
    %v171 = vsel %vm37, %v170, 0.0
    %v172 = vrot.slane %v171, 4
    %v173 = vadd.f32 %v171, %v172
    %v174 = vrot.slane %v173, 2
    %v175 = vadd.f32 %v173, %v174
    %v176 = vrot.slane %v175, 1
    %v177 = vadd.f32 %v175, %v176
    %v178 = vsel %vm169, %v24, 0.0
    %v179 = vsel %vm37, %v178, 0.0
    %v180 = vrot.slane %v179, 4
    %v181 = vadd.f32 %v179, %v180
    %v182 = vrot.slane %v181, 2
    %v183 = vadd.f32 %v181, %v182
    %v184 = vrot.slane %v183, 1
    %v185 = vadd.f32 %v183, %v184
    %s186 = sld [smem:[#allocation2 + $0x8]]
    %v187 = vstv %s186
    %vm188 = vcmp.ge.f32.partialorder %v24, %v187
    %v189 = vsel %vm188, 1.0, 0.0
    %v190 = vsel %vm37, %v189, 0.0
    %v191 = vrot.slane %v190, 4
    %v192 = vadd.f32 %v190, %v191
    %v193 = vrot.slane %v192, 2
    %v194 = vadd.f32 %v192, %v193
    %v195 = vrot.slane %v194, 1
    %v196 = vadd.f32 %v194, %v195
    %v197 = vsel %vm188, %v24, 0.0
    %v198 = vsel %vm37, %v197, 0.0
    %v199 = vrot.slane %v198, 4
    %v200 = vadd.f32 %v198, %v199
    %v201 = vrot.slane %v200, 2
    %v202 = vadd.f32 %v200, %v201
    %v203 = vrot.slane %v202, 1
    %v204 = vadd.f32 %v202, %v203
    %s205 = sld [smem:[#allocation2 + $0x9]]
    %v206 = vstv %s205
    %vm207 = vcmp.ge.f32.partialorder %v24, %v206
    %v208 = vsel %vm207, 1.0, 0.0
    %v209 = vsel %vm37, %v208, 0.0
    %v210 = vrot.slane %v209, 4
    %v211 = vadd.f32 %v209, %v210
    %v212 = vrot.slane %v211, 2
    %v213 = vadd.f32 %v211, %v212
    %v214 = vrot.slane %v213, 1
    %v215 = vadd.f32 %v213, %v214
    %v216 = vsel %vm207, %v24, 0.0
    %v217 = vsel %vm37, %v216, 0.0
    %v218 = vrot.slane %v217, 4
    %v219 = vadd.f32 %v217, %v218
    %v220 = vrot.slane %v219, 2
    %v221 = vadd.f32 %v219, %v220
    %v222 = vrot.slane %v221, 1
    %v223 = vadd.f32 %v221, %v222
    %s224 = sld [smem:[#allocation2 + $0xa]]
    %v225 = vstv %s224
    %vm226 = vcmp.ge.f32.partialorder %v24, %v225
    %v227 = vsel %vm226, 1.0, 0.0
    %v228 = vsel %vm37, %v227, 0.0
    %v229 = vrot.slane %v228, 4
    %v230 = vadd.f32 %v228, %v229
    %v231 = vrot.slane %v230, 2
    %v232 = vadd.f32 %v230, %v231
    %v233 = vrot.slane %v232, 1
    %v234 = vadd.f32 %v232, %v233
    %v235 = vsel %vm226, %v24, 0.0
    %v236 = vsel %vm37, %v235, 0.0
    %v237 = vrot.slane %v236, 4
    %v238 = vadd.f32 %v236, %v237
    %v239 = vrot.slane %v238, 2
    %v240 = vadd.f32 %v238, %v239
    %v241 = vrot.slane %v240, 1
    %v242 = vadd.f32 %v240, %v241
    %s243 = sld [smem:[#allocation2 + $0xb]]
    %v244 = vstv %s243
    %vm245 = vcmp.ge.f32.partialorder %v24, %v244
    %v246 = vsel %vm245, 1.0, 0.0
    %v247 = vsel %vm37, %v246, 0.0
    %v248 = vrot.slane %v247, 4
    %v249 = vadd.f32 %v247, %v248
    %v250 = vrot.slane %v249, 2
    %v251 = vadd.f32 %v249, %v250
    %v252 = vrot.slane %v251, 1
    %v253 = vadd.f32 %v251, %v252
    %v254 = vsel %vm245, %v24, 0.0
    %v255 = vsel %vm37, %v254, 0.0
    %v256 = vrot.slane %v255, 4
    %v257 = vadd.f32 %v255, %v256
    %v258 = vrot.slane %v257, 2
    %v259 = vadd.f32 %v257, %v258
    %v260 = vrot.slane %v259, 1
    %v261 = vadd.f32 %v259, %v260
    %s262 = sld [smem:[#allocation2 + $0xc]]
    %v263 = vstv %s262
    %vm264 = vcmp.ge.f32.partialorder %v24, %v263
    %v265 = vsel %vm264, 1.0, 0.0
    %v266 = vsel %vm37, %v265, 0.0
    %v267 = vrot.slane %v266, 4
    %v268 = vadd.f32 %v266, %v267
    %v269 = vrot.slane %v268, 2
    %v270 = vadd.f32 %v268, %v269
    %v271 = vrot.slane %v270, 1
    %v272 = vadd.f32 %v270, %v271
    %v273 = vsel %vm264, %v24, 0.0
    %v274 = vsel %vm37, %v273, 0.0
    %v275 = vrot.slane %v274, 4
    %v276 = vadd.f32 %v274, %v275
    %v277 = vrot.slane %v276, 2
    %v278 = vadd.f32 %v276, %v277
    %v279 = vrot.slane %v278, 1
    %v280 = vadd.f32 %v278, %v279
    %s281 = sld [smem:[#allocation2 + $0xd]]
    %v282 = vstv %s281
    %vm283 = vcmp.ge.f32.partialorder %v24, %v282
    %v284 = vsel %vm283, 1.0, 0.0
    %v285 = vsel %vm37, %v284, 0.0
    %v286 = vrot.slane %v285, 4
    %v287 = vadd.f32 %v285, %v286
    %v288 = vrot.slane %v287, 2
    %v289 = vadd.f32 %v287, %v288
    %v290 = vrot.slane %v289, 1
    %v291 = vadd.f32 %v289, %v290
    %v292 = vsel %vm283, %v24, 0.0
    %v293 = vsel %vm37, %v292, 0.0
    %v294 = vrot.slane %v293, 4
    %v295 = vadd.f32 %v293, %v294
    %v296 = vrot.slane %v295, 2
    %v297 = vadd.f32 %v295, %v296
    %v298 = vrot.slane %v297, 1
    %v299 = vadd.f32 %v297, %v298
    %s300 = sld [smem:[#allocation2 + $0xe]]
    %v301 = vstv %s300
    %vm302 = vcmp.ge.f32.partialorder %v24, %v301
    %v303 = vsel %vm302, 1.0, 0.0
    %v304 = vsel %vm37, %v303, 0.0
    %v305 = vrot.slane %v304, 4
    %v306 = vadd.f32 %v304, %v305
    %v307 = vrot.slane %v306, 2
    %v308 = vadd.f32 %v306, %v307
    %v309 = vrot.slane %v308, 1
    %v310 = vadd.f32 %v308, %v309
    %v311 = vsel %vm302, %v24, 0.0
    %v312 = vsel %vm37, %v311, 0.0
    %v313 = vrot.slane %v312, 4
    %v314 = vadd.f32 %v312, %v313
    %v315 = vrot.slane %v314, 2
    %v316 = vadd.f32 %v314, %v315
    %v317 = vrot.slane %v316, 1
    %v318 = vadd.f32 %v316, %v317
    %s319 = sld [smem:[#allocation2 + $0xf]]
    %v320 = vstv %s319
    %vm321 = vcmp.ge.f32.partialorder %v24, %v320
    %v322 = vsel %vm321, 1.0, 0.0
    %v323 = vsel %vm37, %v322, 0.0
    %v324 = vrot.slane %v323, 4
    %v325 = vadd.f32 %v323, %v324
    %v326 = vrot.slane %v325, 2
    %v327 = vadd.f32 %v325, %v326
    %v328 = vrot.slane %v327, 1
    %v329 = vadd.f32 %v327, %v328
    %v330 = vsel %vm321, %v24, 0.0
    %v331 = vsel %vm37, %v330, 0.0
    %v332 = vrot.slane %v331, 4
    %v333 = vadd.f32 %v331, %v332
    %v334 = vrot.slane %v333, 2
    %v335 = vadd.f32 %v333, %v334
    %v336 = vrot.slane %v335, 1
    %v337 = vadd.f32 %v335, %v336
    %v338 = vld [vmem:[%s2] sm:$0xff]
    %v339 = vld [vmem:[%s2 + $0x8] sm:$0xff]
    %vm340 = vcmask 1040384
    %v341 = vsel %vm340, %v44, %v63
    %vm342 = vcmask 1041408
    %v343 = vsel %vm342, %v341, %v82
    %vm344 = vcmask 1042432
    %v345 = vsel %vm344, %v343, %v101
    %v346 = vsel %vm37, %v345, %v120
    %vm347 = vcmask 1044480
    %v348 = vsel %vm347, %v346, %v139
    %vm349 = vcmask 1045504
    %v350 = vsel %vm349, %v348, %v158
    %vm351 = vcmask 1046528
    %v352 = vsel %vm351, %v350, %v177
    %v353 = vsel %vm340, %v196, %v215
    %v354 = vsel %vm342, %v353, %v234
    %v355 = vsel %vm344, %v354, %v253
    %v356 = vsel %vm37, %v355, %v272
    %v357 = vsel %vm347, %v356, %v291
    %v358 = vsel %vm349, %v357, %v310
    %v359 = vsel %vm351, %v358, %v329
    %v360 = vadd.f32 %v338, %v352
    %v361 = vadd.f32 %v339, %v359
    %362 = vst [vmem:[%s2] sm:$0xff] %v360
    %363 = vst [vmem:[%s2 + $0x8] sm:$0xff] %v361
    %s364 = scalar_lea.vmem %s2, 16
    %v365 = vld [vmem:[%s364] sm:$0xff]
    %v366 = vld [vmem:[%s364 + $0x8] sm:$0xff]
    %v367 = vsel %vm340, %v52, %v71
    %v368 = vsel %vm342, %v367, %v90
    %v369 = vsel %vm344, %v368, %v109
    %v370 = vsel %vm37, %v369, %v128
    %v371 = vsel %vm347, %v370, %v147
    %v372 = vsel %vm349, %v371, %v166
    %v373 = vsel %vm351, %v372, %v185
    %v374 = vsel %vm340, %v204, %v223
    %v375 = vsel %vm342, %v374, %v242
    %v376 = vsel %vm344, %v375, %v261
    %v377 = vsel %vm37, %v376, %v280
    %v378 = vsel %vm347, %v377, %v299
    %v379 = vsel %vm349, %v378, %v318
    %v380 = vsel %vm351, %v379, %v337
    %v381 = vadd.f32 %v365, %v373
    %v382 = vadd.f32 %v366, %v380
    %383 = vst [vmem:[%s364] sm:$0xff] %v381
    %384 = vst [vmem:[%s364 + $0x8] sm:$0xff] %v382
    // Predicated region
    $region18: #{db_loss.9} parent=1 // pred_check
      _
    $region19: #{db_loss.9} parent=1 // pred_check_branch
      %386 = sbr.rel (0) target = $region21
    $region20: #{db_loss.9} parent=1 // pred_region
      _
    $region21: #{db_loss.9} parent=1 // pred_fallthru
      _
    // Predicated region
    $region22: #{db_loss.9} parent=1 // pred_check
      _
    $region23: #{db_loss.9} parent=1 // pred_check_branch
      %388 = sbr.rel (0) target = $region25
    $region24: #{db_loss.9} parent=1 // pred_region
      _
    $region25: #{db_loss.9} parent=1 // pred_fallthru
      _
    %389 = vsyncpa [#allocation3], 1

</llo_original>
